<compile_context>
chip_gen: v7x
topology: tpu7x:2x2x1
jax: 0.10.0
libtpu: 0.0.40
codegen_flags: <defaults>
</compile_context>

<pallas_src>
import functools
import math

import jax
import jax.numpy as jnp
from jax import lax
from jax.experimental import pallas as pl
from jax.experimental.pallas import tpu as pltpu

NEG_INF = -1e30
EXP_CLAMP = -60.0  # keeps exp() finite under the shared-row-max trick (see _attention_core)


# ----------------------------- shared math helpers (pure jnp, usable in-kernel) ---------------------

def _mm(a, b):
    """[M, K] x [K, N] -> [M, N] with f32 accumulation."""
    return lax.dot_general(a, b, dimension_numbers=(((1,), (0,)), ((), ())),
                           preferred_element_type=jnp.float32)


def _mm_t(a, b):
    """[M, K] x [N, K] -> [M, N]  (a @ b.T, matches PyTorch Linear)."""
    return lax.dot_general(a, b, dimension_numbers=(((1,), (1,)), ((), ())),
                           preferred_element_type=jnp.float32)


def _layer_norm(x, gamma, beta, eps=1e-5):
    mu = jnp.mean(x, axis=-1, keepdims=True)
    xc = x - mu
    var = jnp.mean(xc * xc, axis=-1, keepdims=True)
    return xc * lax.rsqrt(var + eps) * gamma + beta


def _head_eq_mask(n_rows, n_cols, rows_per_grp, cols_per_grp):
    """mask[r, c] = 1.0 iff (r // rows_per_grp) == (c // cols_per_grp).

    Built from int32 iota + float floor (avoids vector integer division)."""
    r = lax.broadcasted_iota(jnp.int32, (n_rows, n_cols), 0).astype(jnp.float32)
    c = lax.broadcasted_iota(jnp.int32, (n_rows, n_cols), 1).astype(jnp.float32)
    rg = jnp.floor((r + 0.5) * (1.0 / rows_per_grp))
    cg = jnp.floor((c + 0.5) * (1.0 / cols_per_grp))
    return (rg == cg).astype(jnp.float32)


def _attention_core(q, k, v, nhead, kbias_tiled, approx):
    """Multi-head attention with all heads batched into single matmuls.

    q: [Lq, E] (bias added, already scaled by 1/sqrt(dh));  k, v: [Lk, E]
    kbias_tiled: [1, nhead*Lk] additive bias (0 / NEG_INF) or None.
    Returns [Lq, E] == concat_h softmax(q_h k_h^T + bias) v_h.
    """
    E = q.shape[1]
    Lk = k.shape[0]
    dh = E // nhead
    HLk = nhead * Lk
    bf16 = jnp.bfloat16

    # Block mask: row r of the replicated K/V belongs to head r//Lk, column e to head e//dh.
    blkmask = _head_eq_mask(HLk, E, Lk, dh)                       # [HLk, E]
    k_rep = jnp.concatenate([k] * nhead, axis=0) * blkmask        # [HLk, E]
    v_rep = jnp.concatenate([v] * nhead, axis=0) * blkmask        # [HLk, E]

    # Scores for ALL heads in one matmul: column h*Lk + j == q_h . k_h[j].
    s = _mm_t(q.astype(bf16), k_rep.astype(bf16))                 # [Lq, HLk] f32
    if kbias_tiled is not None:
        s = s + kbias_tiled

    # Segmented softmax: subtracting the (shared) row max is valid per head segment because
    # softmax is shift-invariant; EXP_CLAMP only affects negligible-probability tails.
    s = s - jnp.max(s, axis=-1, keepdims=True)
    p = jnp.exp(jnp.maximum(s, EXP_CLAMP))                        # [Lq, HLk] f32

    # Per-head denominator broadcast over its segment via one MXU matmul (block-diag ones).
    seg_ones = _head_eq_mask(HLk, HLk, Lk, Lk)                    # [HLk, HLk]
    denom = _mm(p, seg_ones)                                      # [Lq, HLk]
    inv = pl.reciprocal(denom, approx=True) if approx else 1.0 / denom
    p = p * inv

    # P @ V_blocks writes each head's output into its own lane block -> [Lq, E], no concat.
    return _mm(p.astype(bf16), v_rep.astype(bf16))


def _decoder_compute(tgt, mem, qpos, pos, kbias_tiled, w_slab, vec_slab, b1, *, nhead, approx):
    """forward_post semantics for ONE batch element.  Activations are [L, E] f32."""
    E = tgt.shape[1]
    F = b1.shape[1]
    dh = E // nhead
    scale = 1.0 / math.sqrt(dh)
    bf16 = jnp.bfloat16

    # --- packed parameter slab layout (must match _pack_inputs) ---
    w_sa_qk = w_slab[0:2 * E]                    # [2E, E]  rows: Wq ; Wk
    w_sa_v = w_slab[2 * E:3 * E]
    w_sa_o = w_slab[3 * E:4 * E]
    w_ca_q = w_slab[4 * E:5 * E]
    w_ca_k = w_slab[5 * E:6 * E]
    w_ca_v = w_slab[6 * E:7 * E]
    w_ca_o = w_slab[7 * E:8 * E]
    w1 = w_slab[8 * E:8 * E + F]                 # [F, E]
    w2t = w_slab[8 * E + F:8 * E + 2 * F]        # [F, E] == linear2.weight.T

    b_sa_q, b_sa_k, b_sa_v = vec_slab[0:1], vec_slab[1:2], vec_slab[2:3]
    b_sa_o = vec_slab[3:4]
    b_ca_q, b_ca_k, b_ca_v = vec_slab[4:5], vec_slab[5:6], vec_slab[6:7]
    b_ca_o = vec_slab[7:8]
    b2 = vec_slab[8:9]
    g1, be1 = vec_slab[9:10], vec_slab[10:11]
    g2, be2 = vec_slab[11:12], vec_slab[12:13]
    g3, be3 = vec_slab[13:14], vec_slab[14:15]

    # ---------- self attention: q = k = tgt + query_pos, v = tgt ----------
    qk_in = tgt + qpos
    qk_proj = _mm_t(qk_in.astype(bf16), w_sa_qk)                  # fused Q+K projection [T, 2E]
    q = (qk_proj[:, 0:E] + b_sa_q) * scale                        # scale folded into q once
    k = qk_proj[:, E:2 * E] + b_sa_k
    v = _mm_t(tgt.astype(bf16), w_sa_v) + b_sa_v
    sa = _attention_core(q, k, v, nhead, None, approx)
    sa = _mm_t(sa.astype(bf16), w_sa_o) + b_sa_o
    x = _layer_norm(tgt + sa, g1, be1)

    # ---------- cross attention: q = x + query_pos, k = mem + pos, v = mem ----------
    q = (_mm_t((x + qpos).astype(bf16), w_ca_q) + b_ca_q) * scale
    k = _mm_t((mem + pos).astype(bf16), w_ca_k) + b_ca_k
    v = _mm_t(mem.astype(bf16), w_ca_v) + b_ca_v
    ca = _attention_core(q, k, v, nhead, kbias_tiled, approx)
    ca = _mm_t(ca.astype(bf16), w_ca_o) + b_ca_o
    x = _layer_norm(x + ca, g2, be2)

    # ---------- feed-forward (ReLU) ----------
    h = jnp.maximum(_mm_t(x.astype(bf16), w1) + b1, 0.0)          # [T, F]
    y = _mm(h.astype(bf16), w2t) + b2                             # [T, E]
    x = _layer_norm(x + y, g3, be3)
    return x


# ----------------------------------------- Pallas kernel --------------------------------------------

def _decoder_layer_kernel(tgt_ref, mem_ref, qpos_ref, pos_ref, kbias_ref,
                          w_ref, vec_ref, b1_ref, out_ref, *, nhead):
    out_ref[0] = _decoder_compute(
        tgt_ref[0], mem_ref[0], qpos_ref[0], pos_ref[0], kbias_ref[0],
        w_ref[...], vec_ref[...], b1_ref[...],
        nhead=nhead, approx=True)


def _pack_inputs(tgt, memory, params, memory_key_padding_mask, pos, query_pos, nhead):
    """Batch-first activations + packed parameter slabs (shared by kernel wrapper and reference)."""
    T, B, E = tgt.shape
    S = memory.shape[0]
    (sa_win, sa_bin, sa_wout, sa_bout,
     ca_win, ca_bin, ca_wout, ca_bout,
     w1, b1, w2, b2,
     g1, be1, g2, be2, g3, be3) = params
    F = w1.shape[0]

    tgt_bf = jnp.transpose(tgt, (1, 0, 2)).astype(jnp.float32)
    mem_bf = jnp.transpose(memory, (1, 0, 2)).astype(jnp.float32)
    qpos_bf = (jnp.transpose(query_pos, (1, 0, 2)).astype(jnp.float32)
               if query_pos is not None else jnp.zeros_like(tgt_bf))
    pos_bf = (jnp.transpose(pos, (1, 0, 2)).astype(jnp.float32)
              if pos is not None else jnp.zeros_like(mem_bf))

    # Additive key-padding bias (PyTorch convention: True / 1.0 == padded key),
    # pre-tiled over heads so the kernel adds it straight onto the [T, nhead*S] score slab.
    if memory_key_padding_mask is not None:
        m = memory_key_padding_mask.astype(jnp.float32)
        kbias = jnp.where(m > 0.5, NEG_INF, 0.0).astype(jnp.float32)    # [B, S]
    else:
        kbias = jnp.zeros((B, S), jnp.float32)
    kbias_tiled = jnp.tile(kbias, (1, nhead)).reshape(B, 1, nhead * S)

    # One bf16 weight slab, one f32 vector slab (all E-wide biases + LayerNorm), one FFN bias row.
    w_slab = jnp.concatenate(
        [sa_win, sa_wout, ca_win, ca_wout, w1, w2.T], axis=0).astype(jnp.bfloat16)  # [8E+2F, E]
    vec_slab = jnp.concatenate(
        [sa_bin.reshape(3, E), sa_bout.reshape(1, E),
         ca_bin.reshape(3, E), ca_bout.reshape(1, E),
         b2.reshape(1, E),
         g1.reshape(1, E), be1.reshape(1, E),
         g2.reshape(1, E), be2.reshape(1, E),
         g3.reshape(1, E), be3.reshape(1, E)], axis=0).astype(jnp.float32)          # [15, E]
    b1_row = b1.reshape(1, F).astype(jnp.float32)

    return tgt_bf, mem_bf, qpos_bf, pos_bf, kbias_tiled, w_slab, vec_slab, b1_row


def transformer_decoder_layer(tgt, memory, params, *,
                              memory_key_padding_mask=None,
                              pos=None, query_pos=None, nhead=4):
    """tgt: [T, B, E], memory: [S, B, E] (PyTorch seq-first). Returns [T, B, E]."""
    T, B, E = tgt.shape
    S = memory.shape[0]

    packed = _pack_inputs(tgt, memory, params, memory_key_padding_mask, pos, query_pos, nhead)
    tgt_bf, mem_bf, qpos_bf, pos_bf, kbias_tiled, w_slab, vec_slab, b1_row = packed
    F = b1_row.shape[1]
    WR = w_slab.shape[0]

    # Advisory cost estimate so XLA can schedule the surrounding ops around the custom call.
    attn_flops = (2 * T * E * (nhead * T) + 2 * T * (nhead * T) ** 2 + 2 * T * (nhead * T) * E
                  + 2 * T * E * (nhead * S) + 2 * T * (nhead * S) ** 2 + 2 * T * (nhead * S) * E)
    proj_flops = 2 * T * E * 2 * E + 8 * T * E * E + 4 * S * E * E + 4 * T * E * F
    cost = pl.CostEstimate(
        flops=int(B * (attn_flops + proj_flops)),
        transcendentals=int(B * (T * nhead * T + T * nhead * S)),
        bytes_accessed=int(sum(a.size * a.dtype.itemsize for a in packed) + B * T * E * 4))

    out_bf = pl.pallas_call(
        functools.partial(_decoder_layer_kernel, nhead=nhead),
        grid=(B,),
        in_specs=[
            pl.BlockSpec((1, T, E), lambda b: (b, 0, 0)),            # tgt
            pl.BlockSpec((1, S, E), lambda b: (b, 0, 0)),            # memory
            pl.BlockSpec((1, T, E), lambda b: (b, 0, 0)),            # query_pos
            pl.BlockSpec((1, S, E), lambda b: (b, 0, 0)),            # pos
            pl.BlockSpec((1, 1, nhead * S), lambda b: (b, 0, 0)),    # additive key-padding bias
            pl.BlockSpec((WR, E), lambda b: (0, 0)),                 # bf16 weight slab (resident)
            pl.BlockSpec((15, E), lambda b: (0, 0)),                 # bias / LayerNorm slab
            pl.BlockSpec((1, F), lambda b: (0, 0)),                  # FFN hidden bias
        ],
        out_specs=pl.BlockSpec((1, T, E), lambda b: (b, 0, 0)),
        out_shape=jax.ShapeDtypeStruct((B, T, E), jnp.float32),
        compiler_params=pltpu.CompilerParams(dimension_semantics=("parallel",)),
        cost_estimate=cost,
    )(*packed)

    return jnp.transpose(out_bf, (1, 0, 2))


# ----------------------------------------------- main -----------------------------------------------

def _init_params(key, d_model, nhead, dim_feedforward):
    E, F = d_model, dim_feedforward
    ks = jax.random.split(key, 12)
    n = lambda k, shape: (0.05 * jax.random.normal(k, shape)).astype(jnp.float32)
    params = (
        # self-attn: in_proj [3E, E], in_bias [1, 3E], out_proj [E, E], out_bias [1, E]
        n(ks[0], (3 * E, E)), n(ks[1], (1, 3 * E)), n(ks[2], (E, E)), n(ks[3], (1, E)),
        # cross-attn
        n(ks[4], (3 * E, E)), n(ks[5], (1, 3 * E)), n(ks[6], (E, E)), n(ks[7], (1, E)),
        # FFN: linear1 [F, E], b1 [1, F], linear2 [E, F], b2 [1, E]
        n(ks[8], (F, E)), n(ks[9], (1, F)), n(ks[10], (E, F)), n(ks[11], (1, E)),
        # LayerNorm 1/2/3 (gamma=1, beta=0)
        jnp.ones((1, E), jnp.float32), jnp.zeros((1, E), jnp.float32),
        jnp.ones((1, E), jnp.float32), jnp.zeros((1, E), jnp.float32),
        jnp.ones((1, E), jnp.float32), jnp.zeros((1, E), jnp.float32),
    )
    return params


if __name__ == "__main__":
    d_model, nhead, dim_ff = 32, 4, 64
    T, S, B = 8, 16, 2

    key = jax.random.PRNGKey(0)
    k_tgt, k_mem, k_pos, k_qpos, k_par = jax.random.split(key, 5)

    tgt = jax.random.normal(k_tgt, (T, B, d_model), jnp.float32)
    memory = jax.random.normal(k_mem, (S, B, d_model), jnp.float32)
    pos = jax.random.normal(k_pos, (S, B, d_model), jnp.float32)
    query_pos = jax.random.normal(k_qpos, (T, B, d_model), jnp.float32)
    # key padding mask: batch 0 -> no padding; batch 1 -> last 4 memory positions padded.
    mem_kpm = jnp.zeros((B, S), jnp.float32).at[1, S - 4:].set(1.0)

    params = _init_params(k_par, d_model, nhead, dim_ff)

    out = transformer_decoder_layer(
        tgt, memory, params,
        memory_key_padding_mask=mem_kpm, pos=pos, query_pos=query_pos, nhead=nhead)
    out = jax.block_until_ready(out)

    # pure-JAX reference over the SAME packed slabs (only difference: exact reciprocal in softmax)
    tgt_bf, mem_bf, qpos_bf, pos_bf, kbias_tiled, w_slab, vec_slab, b1_row = _pack_inputs(
        tgt, memory, params, mem_kpm, pos, query_pos, nhead)
    ref_rows = [
        _decoder_compute(tgt_bf[b], mem_bf[b], qpos_bf[b], pos_bf[b], kbias_tiled[b],
                         w_slab, vec_slab, b1_row, nhead=nhead, approx=False)
        for b in range(B)
    ]
    ref = jnp.transpose(jnp.stack(ref_rows, axis=0), (1, 0, 2))

    assert out.shape == (T, B, d_model)
    assert bool(jnp.all(jnp.isfinite(out)))
    max_err = float(jnp.max(jnp.abs(out - ref)))
    assert jnp.allclose(out, ref, atol=2e-2, rtol=2e-2), f"kernel mismatch vs reference ({max_err})"

    print("KERNEL_OK")
</pallas_src>

<mosaic_0001>
module attributes {stable_mosaic.version = 11 : i64} {
  func.func @_decoder_layer_kernel(%arg0: i32, %arg1: memref<1x8x32xf32, #tpu.memory_space<vmem>>, %arg2: memref<1x16x32xf32, #tpu.memory_space<vmem>>, %arg3: memref<1x8x32xf32, #tpu.memory_space<vmem>>, %arg4: memref<1x16x32xf32, #tpu.memory_space<vmem>>, %arg5: memref<1x1x64xf32, #tpu.memory_space<vmem>>, %arg6: memref<384x32xbf16, #tpu.memory_space<vmem>>, %arg7: memref<15x32xf32, #tpu.memory_space<vmem>>, %arg8: memref<1x64xf32, #tpu.memory_space<vmem>>, %arg9: memref<1x8x32xf32, #tpu.memory_space<vmem>>) attributes {dimension_semantics = [#tpu.dimension_semantics<parallel>], iteration_bounds = array<i64: 2>, scalar_prefetch = 0 : i64, scratch_operands = 0 : i64, tpu.core_type = #tpu.core_type<tc>, window_params = [{transform_indices = @transform_0, window_bounds = array<i64: 1, 8, 32>}, {transform_indices = @transform_1, window_bounds = array<i64: 1, 16, 32>}, {transform_indices = @transform_2, window_bounds = array<i64: 1, 8, 32>}, {transform_indices = @transform_3, window_bounds = array<i64: 1, 16, 32>}, {transform_indices = @transform_4, window_bounds = array<i64: 1, 1, 64>}, {pipeline_mode = #tpu.pipeline_mode<synchronous>, transform_indices = @transform_5, window_bounds = array<i64: 384, 32>}, {pipeline_mode = #tpu.pipeline_mode<synchronous>, transform_indices = @transform_6, window_bounds = array<i64: 15, 32>}, {pipeline_mode = #tpu.pipeline_mode<synchronous>, transform_indices = @transform_7, window_bounds = array<i64: 1, 64>}, {transform_indices = @transform_8, window_bounds = array<i64: 1, 8, 32>}]} {
    %c0 = arith.constant 0 : index
    %c0_0 = arith.constant 0 : index
    %c0_1 = arith.constant 0 : index
    %0 = vector.load %arg1[%c0, %c0_0, %c0_1] : memref<1x8x32xf32, #tpu.memory_space<vmem>>, vector<1x8x32xf32>
    %1 = vector.shape_cast %0 : vector<1x8x32xf32> to vector<8x32xf32>
    %c0_2 = arith.constant 0 : index
    %c0_3 = arith.constant 0 : index
    %c0_4 = arith.constant 0 : index
    %2 = vector.load %arg2[%c0_2, %c0_3, %c0_4] : memref<1x16x32xf32, #tpu.memory_space<vmem>>, vector<1x16x32xf32>
    %3 = vector.shape_cast %2 : vector<1x16x32xf32> to vector<16x32xf32>
    %c0_5 = arith.constant 0 : index
    %c0_6 = arith.constant 0 : index
    %c0_7 = arith.constant 0 : index
    %4 = vector.load %arg3[%c0_5, %c0_6, %c0_7] : memref<1x8x32xf32, #tpu.memory_space<vmem>>, vector<1x8x32xf32>
    %5 = vector.shape_cast %4 : vector<1x8x32xf32> to vector<8x32xf32>
    %c0_8 = arith.constant 0 : index
    %c0_9 = arith.constant 0 : index
    %c0_10 = arith.constant 0 : index
    %6 = vector.load %arg4[%c0_8, %c0_9, %c0_10] : memref<1x16x32xf32, #tpu.memory_space<vmem>>, vector<1x16x32xf32>
    %7 = vector.shape_cast %6 : vector<1x16x32xf32> to vector<16x32xf32>
    %c0_11 = arith.constant 0 : index
    %c0_12 = arith.constant 0 : index
    %c0_13 = arith.constant 0 : index
    %8 = vector.load %arg5[%c0_11, %c0_12, %c0_13] : memref<1x1x64xf32, #tpu.memory_space<vmem>>, vector<1x1x64xf32>
    %9 = vector.shape_cast %8 : vector<1x1x64xf32> to vector<1x64xf32>
    %c0_14 = arith.constant 0 : index
    %c0_15 = arith.constant 0 : index
    %10 = vector.load %arg6[%c0_14, %c0_15] : memref<384x32xbf16, #tpu.memory_space<vmem>>, vector<384x32xbf16>
    %c0_16 = arith.constant 0 : index
    %c0_17 = arith.constant 0 : index
    %11 = vector.load %arg7[%c0_16, %c0_17] : memref<15x32xf32, #tpu.memory_space<vmem>>, vector<15x32xf32>
    %c0_18 = arith.constant 0 : index
    %c0_19 = arith.constant 0 : index
    %12 = vector.load %arg8[%c0_18, %c0_19] : memref<1x64xf32, #tpu.memory_space<vmem>>, vector<1x64xf32>
    %13 = vector.extract_strided_slice %10 {offsets = [0, 0], sizes = [64, 32], strides = [1, 1]} : vector<384x32xbf16> to vector<64x32xbf16>
    %14 = vector.extract_strided_slice %10 {offsets = [64, 0], sizes = [32, 32], strides = [1, 1]} : vector<384x32xbf16> to vector<32x32xbf16>
    %15 = vector.extract_strided_slice %10 {offsets = [96, 0], sizes = [32, 32], strides = [1, 1]} : vector<384x32xbf16> to vector<32x32xbf16>
    %16 = vector.extract_strided_slice %10 {offsets = [128, 0], sizes = [32, 32], strides = [1, 1]} : vector<384x32xbf16> to vector<32x32xbf16>
    %17 = vector.extract_strided_slice %10 {offsets = [160, 0], sizes = [32, 32], strides = [1, 1]} : vector<384x32xbf16> to vector<32x32xbf16>
    %18 = vector.extract_strided_slice %10 {offsets = [192, 0], sizes = [32, 32], strides = [1, 1]} : vector<384x32xbf16> to vector<32x32xbf16>
    %19 = vector.extract_strided_slice %10 {offsets = [224, 0], sizes = [32, 32], strides = [1, 1]} : vector<384x32xbf16> to vector<32x32xbf16>
    %20 = vector.extract_strided_slice %10 {offsets = [256, 0], sizes = [64, 32], strides = [1, 1]} : vector<384x32xbf16> to vector<64x32xbf16>
    %21 = vector.extract_strided_slice %10 {offsets = [320, 0], sizes = [64, 32], strides = [1, 1]} : vector<384x32xbf16> to vector<64x32xbf16>
    %22 = vector.extract_strided_slice %11 {offsets = [0, 0], sizes = [1, 32], strides = [1, 1]} : vector<15x32xf32> to vector<1x32xf32>
    %23 = vector.extract_strided_slice %11 {offsets = [1, 0], sizes = [1, 32], strides = [1, 1]} : vector<15x32xf32> to vector<1x32xf32>
    %24 = vector.extract_strided_slice %11 {offsets = [2, 0], sizes = [1, 32], strides = [1, 1]} : vector<15x32xf32> to vector<1x32xf32>
    %25 = vector.extract_strided_slice %11 {offsets = [3, 0], sizes = [1, 32], strides = [1, 1]} : vector<15x32xf32> to vector<1x32xf32>
    %26 = vector.extract_strided_slice %11 {offsets = [4, 0], sizes = [1, 32], strides = [1, 1]} : vector<15x32xf32> to vector<1x32xf32>
    %27 = vector.extract_strided_slice %11 {offsets = [5, 0], sizes = [1, 32], strides = [1, 1]} : vector<15x32xf32> to vector<1x32xf32>
    %28 = vector.extract_strided_slice %11 {offsets = [6, 0], sizes = [1, 32], strides = [1, 1]} : vector<15x32xf32> to vector<1x32xf32>
    %29 = vector.extract_strided_slice %11 {offsets = [7, 0], sizes = [1, 32], strides = [1, 1]} : vector<15x32xf32> to vector<1x32xf32>
    %30 = vector.extract_strided_slice %11 {offsets = [8, 0], sizes = [1, 32], strides = [1, 1]} : vector<15x32xf32> to vector<1x32xf32>
    %31 = vector.extract_strided_slice %11 {offsets = [9, 0], sizes = [1, 32], strides = [1, 1]} : vector<15x32xf32> to vector<1x32xf32>
    %32 = vector.extract_strided_slice %11 {offsets = [10, 0], sizes = [1, 32], strides = [1, 1]} : vector<15x32xf32> to vector<1x32xf32>
    %33 = vector.extract_strided_slice %11 {offsets = [11, 0], sizes = [1, 32], strides = [1, 1]} : vector<15x32xf32> to vector<1x32xf32>
    %34 = vector.extract_strided_slice %11 {offsets = [12, 0], sizes = [1, 32], strides = [1, 1]} : vector<15x32xf32> to vector<1x32xf32>
    %35 = vector.extract_strided_slice %11 {offsets = [13, 0], sizes = [1, 32], strides = [1, 1]} : vector<15x32xf32> to vector<1x32xf32>
    %36 = vector.extract_strided_slice %11 {offsets = [14, 0], sizes = [1, 32], strides = [1, 1]} : vector<15x32xf32> to vector<1x32xf32>
    %37 = arith.addf %1, %5 : vector<8x32xf32>
    %38 = arith.truncf %37 : vector<8x32xf32> to vector<8x32xbf16>
    %cst = arith.constant dense<0.000000e+00> : vector<8x64xf32>
    %39 = tpu.matmul %38, %13, %cst {dimension_numbers = #tpu.dot_dimension_numbers<[1], [1], [0], [0], [0, 0, 1, 0], [], []>} : vector<8x32xbf16>, vector<64x32xbf16>, vector<8x64xf32> -> vector<8x64xf32>
    %40 = vector.extract_strided_slice %39 {offsets = [0, 0], sizes = [8, 32], strides = [1, 1]} : vector<8x64xf32> to vector<8x32xf32>
    %41 = vector.broadcast %22 : vector<1x32xf32> to vector<8x32xf32>
    %42 = arith.addf %40, %41 : vector<8x32xf32>
    %cst_20 = arith.constant 0.353553385 : f32
    %43 = vector.broadcast %cst_20 : f32 to vector<8x32xf32>
    %44 = arith.mulf %42, %43 : vector<8x32xf32>
    %45 = vector.extract_strided_slice %39 {offsets = [0, 32], sizes = [8, 32], strides = [1, 1]} : vector<8x64xf32> to vector<8x32xf32>
    %46 = vector.broadcast %23 : vector<1x32xf32> to vector<8x32xf32>
    %47 = arith.addf %45, %46 : vector<8x32xf32>
    %48 = arith.truncf %1 : vector<8x32xf32> to vector<8x32xbf16>
    %cst_21 = arith.constant dense<0.000000e+00> : vector<8x32xf32>
    %49 = tpu.matmul %48, %14, %cst_21 {dimension_numbers = #tpu.dot_dimension_numbers<[1], [1], [0], [0], [0, 0, 1, 0], [], []>} : vector<8x32xbf16>, vector<32x32xbf16>, vector<8x32xf32> -> vector<8x32xf32>
    %50 = vector.broadcast %24 : vector<1x32xf32> to vector<8x32xf32>
    %51 = arith.addf %49, %50 : vector<8x32xf32>
    %52 = tpu.iota {dimensions = array<i32: 0>} : vector<32x32xi32>
    %53 = arith.sitofp %52 : vector<32x32xi32> to vector<32x32xf32>
    %54 = tpu.iota {dimensions = array<i32: 1>} : vector<32x32xi32>
    %55 = arith.sitofp %54 : vector<32x32xi32> to vector<32x32xf32>
    %cst_22 = arith.constant 5.000000e-01 : f32
    %56 = vector.broadcast %cst_22 : f32 to vector<32x32xf32>
    %57 = arith.addf %53, %56 : vector<32x32xf32>
    %cst_23 = arith.constant 1.250000e-01 : f32
    %58 = vector.broadcast %cst_23 : f32 to vector<32x32xf32>
    %59 = arith.mulf %57, %58 : vector<32x32xf32>
    %60 = math.floor %59 : vector<32x32xf32>
    %cst_24 = arith.constant 5.000000e-01 : f32
    %61 = vector.broadcast %cst_24 : f32 to vector<32x32xf32>
    %62 = arith.addf %55, %61 : vector<32x32xf32>
    %cst_25 = arith.constant 1.250000e-01 : f32
    %63 = vector.broadcast %cst_25 : f32 to vector<32x32xf32>
    %64 = arith.mulf %62, %63 : vector<32x32xf32>
    %65 = math.floor %64 : vector<32x32xf32>
    %66 = arith.cmpf oeq, %60, %65 : vector<32x32xf32>
    %67 = arith.extui %66 : vector<32x32xi1> to vector<32x32xi32>
    %68 = arith.sitofp %67 : vector<32x32xi32> to vector<32x32xf32>
    %69 = tpu.concatenate %47, %47, %47, %47 in 0 : vector<8x32xf32>, vector<8x32xf32>, vector<8x32xf32>, vector<8x32xf32> -> vector<32x32xf32>
    %70 = arith.mulf %69, %68 : vector<32x32xf32>
    %71 = tpu.concatenate %51, %51, %51, %51 in 0 : vector<8x32xf32>, vector<8x32xf32>, vector<8x32xf32>, vector<8x32xf32> -> vector<32x32xf32>
    %72 = arith.mulf %71, %68 : vector<32x32xf32>
    %73 = arith.truncf %44 : vector<8x32xf32> to vector<8x32xbf16>
    %74 = arith.truncf %70 : vector<32x32xf32> to vector<32x32xbf16>
    %cst_26 = arith.constant dense<0.000000e+00> : vector<8x32xf32>
    %75 = tpu.matmul %73, %74, %cst_26 {dimension_numbers = #tpu.dot_dimension_numbers<[1], [1], [0], [0], [0, 0, 1, 0], [], []>} : vector<8x32xbf16>, vector<32x32xbf16>, vector<8x32xf32> -> vector<8x32xf32>
    %cst_27 = arith.constant dense<0xFF800000> : vector<8xf32>
    %76 = vector.multi_reduction <maximumf>, %75, %cst_27 [1] : vector<8x32xf32> to vector<8xf32>
    %77 = vector.shape_cast %76 : vector<8xf32> to vector<8x1xf32>
    %78 = vector.broadcast %77 : vector<8x1xf32> to vector<8x32xf32>
    %79 = arith.subf %75, %78 : vector<8x32xf32>
    %cst_28 = arith.constant -6.000000e+01 : f32
    %80 = vector.broadcast %cst_28 : f32 to vector<8x32xf32>
    %81 = arith.maximumf %79, %80 : vector<8x32xf32>
    %82 = math.exp %81 : vector<8x32xf32>
    %83 = tpu.iota {dimensions = array<i32: 0>} : vector<32x32xi32>
    %84 = arith.sitofp %83 : vector<32x32xi32> to vector<32x32xf32>
    %85 = tpu.iota {dimensions = array<i32: 1>} : vector<32x32xi32>
    %86 = arith.sitofp %85 : vector<32x32xi32> to vector<32x32xf32>
    %cst_29 = arith.constant 5.000000e-01 : f32
    %87 = vector.broadcast %cst_29 : f32 to vector<32x32xf32>
    %88 = arith.addf %84, %87 : vector<32x32xf32>
    %cst_30 = arith.constant 1.250000e-01 : f32
    %89 = vector.broadcast %cst_30 : f32 to vector<32x32xf32>
    %90 = arith.mulf %88, %89 : vector<32x32xf32>
    %91 = math.floor %90 : vector<32x32xf32>
    %cst_31 = arith.constant 5.000000e-01 : f32
    %92 = vector.broadcast %cst_31 : f32 to vector<32x32xf32>
    %93 = arith.addf %86, %92 : vector<32x32xf32>
    %cst_32 = arith.constant 1.250000e-01 : f32
    %94 = vector.broadcast %cst_32 : f32 to vector<32x32xf32>
    %95 = arith.mulf %93, %94 : vector<32x32xf32>
    %96 = math.floor %95 : vector<32x32xf32>
    %97 = arith.cmpf oeq, %91, %96 : vector<32x32xf32>
    %98 = arith.extui %97 : vector<32x32xi1> to vector<32x32xi32>
    %99 = arith.sitofp %98 : vector<32x32xi32> to vector<32x32xf32>
    %cst_33 = arith.constant dense<0.000000e+00> : vector<8x32xf32>
    %100 = tpu.matmul %82, %99, %cst_33 {dimension_numbers = #tpu.dot_dimension_numbers<[1], [0], [0], [1], [0, 0, 1, 1], [], []>} : vector<8x32xf32>, vector<32x32xf32>, vector<8x32xf32> -> vector<8x32xf32>
    %101 = tpu.reciprocal %100 {approx = true} : vector<8x32xf32> -> vector<8x32xf32>
    %102 = arith.mulf %82, %101 : vector<8x32xf32>
    %103 = arith.truncf %102 : vector<8x32xf32> to vector<8x32xbf16>
    %104 = arith.truncf %72 : vector<32x32xf32> to vector<32x32xbf16>
    %cst_34 = arith.constant dense<0.000000e+00> : vector<8x32xf32>
    %105 = tpu.matmul %103, %104, %cst_34 {dimension_numbers = #tpu.dot_dimension_numbers<[1], [0], [0], [1], [0, 0, 1, 1], [], []>} : vector<8x32xbf16>, vector<32x32xbf16>, vector<8x32xf32> -> vector<8x32xf32>
    %106 = arith.truncf %105 : vector<8x32xf32> to vector<8x32xbf16>
    %cst_35 = arith.constant dense<0.000000e+00> : vector<8x32xf32>
    %107 = tpu.matmul %106, %15, %cst_35 {dimension_numbers = #tpu.dot_dimension_numbers<[1], [1], [0], [0], [0, 0, 1, 0], [], []>} : vector<8x32xbf16>, vector<32x32xbf16>, vector<8x32xf32> -> vector<8x32xf32>
    %108 = vector.broadcast %25 : vector<1x32xf32> to vector<8x32xf32>
    %109 = arith.addf %107, %108 : vector<8x32xf32>
    %110 = arith.addf %1, %109 : vector<8x32xf32>
    %cst_36 = arith.constant dense<0.000000e+00> : vector<8xf32>
    %111 = vector.multi_reduction <add>, %110, %cst_36 [1] : vector<8x32xf32> to vector<8xf32>
    %112 = vector.shape_cast %111 : vector<8xf32> to vector<8x1xf32>
    %cst_37 = arith.constant 3.200000e+01 : f32
    %113 = vector.broadcast %cst_37 : f32 to vector<8x1xf32>
    %114 = arith.divf %112, %113 : vector<8x1xf32>
    %115 = vector.broadcast %114 : vector<8x1xf32> to vector<8x32xf32>
    %116 = arith.subf %110, %115 : vector<8x32xf32>
    %117 = arith.mulf %116, %116 : vector<8x32xf32>
    %cst_38 = arith.constant dense<0.000000e+00> : vector<8xf32>
    %118 = vector.multi_reduction <add>, %117, %cst_38 [1] : vector<8x32xf32> to vector<8xf32>
    %119 = vector.shape_cast %118 : vector<8xf32> to vector<8x1xf32>
    %cst_39 = arith.constant 3.200000e+01 : f32
    %120 = vector.broadcast %cst_39 : f32 to vector<8x1xf32>
    %121 = arith.divf %119, %120 : vector<8x1xf32>
    %cst_40 = arith.constant 9.99999974E-6 : f32
    %122 = vector.broadcast %cst_40 : f32 to vector<8x1xf32>
    %123 = arith.addf %121, %122 : vector<8x1xf32>
    %124 = math.rsqrt %123 : vector<8x1xf32>
    %125 = vector.broadcast %124 : vector<8x1xf32> to vector<8x32xf32>
    %126 = arith.mulf %116, %125 : vector<8x32xf32>
    %127 = vector.broadcast %31 : vector<1x32xf32> to vector<8x32xf32>
    %128 = arith.mulf %126, %127 : vector<8x32xf32>
    %129 = vector.broadcast %32 : vector<1x32xf32> to vector<8x32xf32>
    %130 = arith.addf %128, %129 : vector<8x32xf32>
    %131 = arith.addf %130, %5 : vector<8x32xf32>
    %132 = arith.truncf %131 : vector<8x32xf32> to vector<8x32xbf16>
    %cst_41 = arith.constant dense<0.000000e+00> : vector<8x32xf32>
    %133 = tpu.matmul %132, %16, %cst_41 {dimension_numbers = #tpu.dot_dimension_numbers<[1], [1], [0], [0], [0, 0, 1, 0], [], []>} : vector<8x32xbf16>, vector<32x32xbf16>, vector<8x32xf32> -> vector<8x32xf32>
    %134 = vector.broadcast %26 : vector<1x32xf32> to vector<8x32xf32>
    %135 = arith.addf %133, %134 : vector<8x32xf32>
    %cst_42 = arith.constant 0.353553385 : f32
    %136 = vector.broadcast %cst_42 : f32 to vector<8x32xf32>
    %137 = arith.mulf %135, %136 : vector<8x32xf32>
    %138 = arith.addf %3, %7 : vector<16x32xf32>
    %139 = arith.truncf %138 : vector<16x32xf32> to vector<16x32xbf16>
    %cst_43 = arith.constant dense<0.000000e+00> : vector<16x32xf32>
    %140 = tpu.matmul %139, %17, %cst_43 {dimension_numbers = #tpu.dot_dimension_numbers<[1], [1], [0], [0], [0, 0, 1, 0], [], []>} : vector<16x32xbf16>, vector<32x32xbf16>, vector<16x32xf32> -> vector<16x32xf32>
    %141 = vector.broadcast %27 : vector<1x32xf32> to vector<16x32xf32>
    %142 = arith.addf %140, %141 : vector<16x32xf32>
    %143 = arith.truncf %3 : vector<16x32xf32> to vector<16x32xbf16>
    %cst_44 = arith.constant dense<0.000000e+00> : vector<16x32xf32>
    %144 = tpu.matmul %143, %18, %cst_44 {dimension_numbers = #tpu.dot_dimension_numbers<[1], [1], [0], [0], [0, 0, 1, 0], [], []>} : vector<16x32xbf16>, vector<32x32xbf16>, vector<16x32xf32> -> vector<16x32xf32>
    %145 = vector.broadcast %28 : vector<1x32xf32> to vector<16x32xf32>
    %146 = arith.addf %144, %145 : vector<16x32xf32>
    %147 = tpu.iota {dimensions = array<i32: 0>} : vector<64x32xi32>
    %148 = arith.sitofp %147 : vector<64x32xi32> to vector<64x32xf32>
    %149 = tpu.iota {dimensions = array<i32: 1>} : vector<64x32xi32>
    %150 = arith.sitofp %149 : vector<64x32xi32> to vector<64x32xf32>
    %cst_45 = arith.constant 5.000000e-01 : f32
    %151 = vector.broadcast %cst_45 : f32 to vector<64x32xf32>
    %152 = arith.addf %148, %151 : vector<64x32xf32>
    %cst_46 = arith.constant 6.250000e-02 : f32
    %153 = vector.broadcast %cst_46 : f32 to vector<64x32xf32>
    %154 = arith.mulf %152, %153 : vector<64x32xf32>
    %155 = math.floor %154 : vector<64x32xf32>
    %cst_47 = arith.constant 5.000000e-01 : f32
    %156 = vector.broadcast %cst_47 : f32 to vector<64x32xf32>
    %157 = arith.addf %150, %156 : vector<64x32xf32>
    %cst_48 = arith.constant 1.250000e-01 : f32
    %158 = vector.broadcast %cst_48 : f32 to vector<64x32xf32>
    %159 = arith.mulf %157, %158 : vector<64x32xf32>
    %160 = math.floor %159 : vector<64x32xf32>
    %161 = arith.cmpf oeq, %155, %160 : vector<64x32xf32>
    %162 = arith.extui %161 : vector<64x32xi1> to vector<64x32xi32>
    %163 = arith.sitofp %162 : vector<64x32xi32> to vector<64x32xf32>
    %164 = tpu.concatenate %142, %142, %142, %142 in 0 : vector<16x32xf32>, vector<16x32xf32>, vector<16x32xf32>, vector<16x32xf32> -> vector<64x32xf32>
    %165 = arith.mulf %164, %163 : vector<64x32xf32>
    %166 = tpu.concatenate %146, %146, %146, %146 in 0 : vector<16x32xf32>, vector<16x32xf32>, vector<16x32xf32>, vector<16x32xf32> -> vector<64x32xf32>
    %167 = arith.mulf %166, %163 : vector<64x32xf32>
    %168 = arith.truncf %137 : vector<8x32xf32> to vector<8x32xbf16>
    %169 = arith.truncf %165 : vector<64x32xf32> to vector<64x32xbf16>
    %cst_49 = arith.constant dense<0.000000e+00> : vector<8x64xf32>
    %170 = tpu.matmul %168, %169, %cst_49 {dimension_numbers = #tpu.dot_dimension_numbers<[1], [1], [0], [0], [0, 0, 1, 0], [], []>} : vector<8x32xbf16>, vector<64x32xbf16>, vector<8x64xf32> -> vector<8x64xf32>
    %171 = vector.broadcast %9 : vector<1x64xf32> to vector<8x64xf32>
    %172 = arith.addf %170, %171 : vector<8x64xf32>
    %cst_50 = arith.constant dense<0xFF800000> : vector<8xf32>
    %173 = vector.multi_reduction <maximumf>, %172, %cst_50 [1] : vector<8x64xf32> to vector<8xf32>
    %174 = vector.shape_cast %173 : vector<8xf32> to vector<8x1xf32>
    %175 = vector.broadcast %174 : vector<8x1xf32> to vector<8x64xf32>
    %176 = arith.subf %172, %175 : vector<8x64xf32>
    %cst_51 = arith.constant -6.000000e+01 : f32
    %177 = vector.broadcast %cst_51 : f32 to vector<8x64xf32>
    %178 = arith.maximumf %176, %177 : vector<8x64xf32>
    %179 = math.exp %178 : vector<8x64xf32>
    %180 = tpu.iota {dimensions = array<i32: 0>} : vector<64x64xi32>
    %181 = arith.sitofp %180 : vector<64x64xi32> to vector<64x64xf32>
    %182 = tpu.iota {dimensions = array<i32: 1>} : vector<64x64xi32>
    %183 = arith.sitofp %182 : vector<64x64xi32> to vector<64x64xf32>
    %cst_52 = arith.constant 5.000000e-01 : f32
    %184 = vector.broadcast %cst_52 : f32 to vector<64x64xf32>
    %185 = arith.addf %181, %184 : vector<64x64xf32>
    %cst_53 = arith.constant 6.250000e-02 : f32
    %186 = vector.broadcast %cst_53 : f32 to vector<64x64xf32>
    %187 = arith.mulf %185, %186 : vector<64x64xf32>
    %188 = math.floor %187 : vector<64x64xf32>
    %cst_54 = arith.constant 5.000000e-01 : f32
    %189 = vector.broadcast %cst_54 : f32 to vector<64x64xf32>
    %190 = arith.addf %183, %189 : vector<64x64xf32>
    %cst_55 = arith.constant 6.250000e-02 : f32
    %191 = vector.broadcast %cst_55 : f32 to vector<64x64xf32>
    %192 = arith.mulf %190, %191 : vector<64x64xf32>
    %193 = math.floor %192 : vector<64x64xf32>
    %194 = arith.cmpf oeq, %188, %193 : vector<64x64xf32>
    %195 = arith.extui %194 : vector<64x64xi1> to vector<64x64xi32>
    %196 = arith.sitofp %195 : vector<64x64xi32> to vector<64x64xf32>
    %cst_56 = arith.constant dense<0.000000e+00> : vector<8x64xf32>
    %197 = tpu.matmul %179, %196, %cst_56 {dimension_numbers = #tpu.dot_dimension_numbers<[1], [0], [0], [1], [0, 0, 1, 1], [], []>} : vector<8x64xf32>, vector<64x64xf32>, vector<8x64xf32> -> vector<8x64xf32>
    %198 = tpu.reciprocal %197 {approx = true} : vector<8x64xf32> -> vector<8x64xf32>
    %199 = arith.mulf %179, %198 : vector<8x64xf32>
    %200 = arith.truncf %199 : vector<8x64xf32> to vector<8x64xbf16>
    %201 = arith.truncf %167 : vector<64x32xf32> to vector<64x32xbf16>
    %cst_57 = arith.constant dense<0.000000e+00> : vector<8x32xf32>
    %202 = tpu.matmul %200, %201, %cst_57 {dimension_numbers = #tpu.dot_dimension_numbers<[1], [0], [0], [1], [0, 0, 1, 1], [], []>} : vector<8x64xbf16>, vector<64x32xbf16>, vector<8x32xf32> -> vector<8x32xf32>
    %203 = arith.truncf %202 : vector<8x32xf32> to vector<8x32xbf16>
    %cst_58 = arith.constant dense<0.000000e+00> : vector<8x32xf32>
    %204 = tpu.matmul %203, %19, %cst_58 {dimension_numbers = #tpu.dot_dimension_numbers<[1], [1], [0], [0], [0, 0, 1, 0], [], []>} : vector<8x32xbf16>, vector<32x32xbf16>, vector<8x32xf32> -> vector<8x32xf32>
    %205 = vector.broadcast %29 : vector<1x32xf32> to vector<8x32xf32>
    %206 = arith.addf %204, %205 : vector<8x32xf32>
    %207 = arith.addf %130, %206 : vector<8x32xf32>
    %cst_59 = arith.constant dense<0.000000e+00> : vector<8xf32>
    %208 = vector.multi_reduction <add>, %207, %cst_59 [1] : vector<8x32xf32> to vector<8xf32>
    %209 = vector.shape_cast %208 : vector<8xf32> to vector<8x1xf32>
    %cst_60 = arith.constant 3.200000e+01 : f32
    %210 = vector.broadcast %cst_60 : f32 to vector<8x1xf32>
    %211 = arith.divf %209, %210 : vector<8x1xf32>
    %212 = vector.broadcast %211 : vector<8x1xf32> to vector<8x32xf32>
    %213 = arith.subf %207, %212 : vector<8x32xf32>
    %214 = arith.mulf %213, %213 : vector<8x32xf32>
    %cst_61 = arith.constant dense<0.000000e+00> : vector<8xf32>
    %215 = vector.multi_reduction <add>, %214, %cst_61 [1] : vector<8x32xf32> to vector<8xf32>
    %216 = vector.shape_cast %215 : vector<8xf32> to vector<8x1xf32>
    %cst_62 = arith.constant 3.200000e+01 : f32
    %217 = vector.broadcast %cst_62 : f32 to vector<8x1xf32>
    %218 = arith.divf %216, %217 : vector<8x1xf32>
    %cst_63 = arith.constant 9.99999974E-6 : f32
    %219 = vector.broadcast %cst_63 : f32 to vector<8x1xf32>
    %220 = arith.addf %218, %219 : vector<8x1xf32>
    %221 = math.rsqrt %220 : vector<8x1xf32>
    %222 = vector.broadcast %221 : vector<8x1xf32> to vector<8x32xf32>
    %223 = arith.mulf %213, %222 : vector<8x32xf32>
    %224 = vector.broadcast %33 : vector<1x32xf32> to vector<8x32xf32>
    %225 = arith.mulf %223, %224 : vector<8x32xf32>
    %226 = vector.broadcast %34 : vector<1x32xf32> to vector<8x32xf32>
    %227 = arith.addf %225, %226 : vector<8x32xf32>
    %228 = arith.truncf %227 : vector<8x32xf32> to vector<8x32xbf16>
    %cst_64 = arith.constant dense<0.000000e+00> : vector<8x64xf32>
    %229 = tpu.matmul %228, %20, %cst_64 {dimension_numbers = #tpu.dot_dimension_numbers<[1], [1], [0], [0], [0, 0, 1, 0], [], []>} : vector<8x32xbf16>, vector<64x32xbf16>, vector<8x64xf32> -> vector<8x64xf32>
    %230 = vector.broadcast %12 : vector<1x64xf32> to vector<8x64xf32>
    %231 = arith.addf %229, %230 : vector<8x64xf32>
    %cst_65 = arith.constant 0.000000e+00 : f32
    %232 = vector.broadcast %cst_65 : f32 to vector<8x64xf32>
    %233 = arith.maximumf %231, %232 : vector<8x64xf32>
    %234 = arith.truncf %233 : vector<8x64xf32> to vector<8x64xbf16>
    %cst_66 = arith.constant dense<0.000000e+00> : vector<8x32xf32>
    %235 = tpu.matmul %234, %21, %cst_66 {dimension_numbers = #tpu.dot_dimension_numbers<[1], [0], [0], [1], [0, 0, 1, 1], [], []>} : vector<8x64xbf16>, vector<64x32xbf16>, vector<8x32xf32> -> vector<8x32xf32>
    %236 = vector.broadcast %30 : vector<1x32xf32> to vector<8x32xf32>
    %237 = arith.addf %235, %236 : vector<8x32xf32>
    %238 = arith.addf %227, %237 : vector<8x32xf32>
    %cst_67 = arith.constant dense<0.000000e+00> : vector<8xf32>
    %239 = vector.multi_reduction <add>, %238, %cst_67 [1] : vector<8x32xf32> to vector<8xf32>
    %240 = vector.shape_cast %239 : vector<8xf32> to vector<8x1xf32>
    %cst_68 = arith.constant 3.200000e+01 : f32
    %241 = vector.broadcast %cst_68 : f32 to vector<8x1xf32>
    %242 = arith.divf %240, %241 : vector<8x1xf32>
    %243 = vector.broadcast %242 : vector<8x1xf32> to vector<8x32xf32>
    %244 = arith.subf %238, %243 : vector<8x32xf32>
    %245 = arith.mulf %244, %244 : vector<8x32xf32>
    %cst_69 = arith.constant dense<0.000000e+00> : vector<8xf32>
    %246 = vector.multi_reduction <add>, %245, %cst_69 [1] : vector<8x32xf32> to vector<8xf32>
    %247 = vector.shape_cast %246 : vector<8xf32> to vector<8x1xf32>
    %cst_70 = arith.constant 3.200000e+01 : f32
    %248 = vector.broadcast %cst_70 : f32 to vector<8x1xf32>
    %249 = arith.divf %247, %248 : vector<8x1xf32>
    %cst_71 = arith.constant 9.99999974E-6 : f32
    %250 = vector.broadcast %cst_71 : f32 to vector<8x1xf32>
    %251 = arith.addf %249, %250 : vector<8x1xf32>
    %252 = math.rsqrt %251 : vector<8x1xf32>
    %253 = vector.broadcast %252 : vector<8x1xf32> to vector<8x32xf32>
    %254 = arith.mulf %244, %253 : vector<8x32xf32>
    %255 = vector.broadcast %35 : vector<1x32xf32> to vector<8x32xf32>
    %256 = arith.mulf %254, %255 : vector<8x32xf32>
    %257 = vector.broadcast %36 : vector<1x32xf32> to vector<8x32xf32>
    %258 = arith.addf %256, %257 : vector<8x32xf32>
    %c0_72 = arith.constant 0 : index
    %c0_73 = arith.constant 0 : index
    %c0_74 = arith.constant 0 : index
    %259 = vector.load %arg9[%c0_72, %c0_73, %c0_74] : memref<1x8x32xf32, #tpu.memory_space<vmem>>, vector<1x8x32xf32>
    %260 = vector.shape_cast %259 : vector<1x8x32xf32> to vector<8x32xf32>
    %261 = vector.shape_cast %258 : vector<8x32xf32> to vector<1x8x32xf32>
    tpu.vector_store %arg9[%c0_72, %c0_73, %c0_74], %261 {strides = array<i32>} : memref<1x8x32xf32, #tpu.memory_space<vmem>>, vector<1x8x32xf32>,
    return
  }
  func.func @transform_0(%arg0: i32) -> (i32, i32, i32) {
    %c0_i32 = arith.constant 0 : i32
    %c0_i32_0 = arith.constant 0 : i32
    %c0_i32_1 = arith.constant 0 : i32
    return %arg0, %c0_i32, %c0_i32_0 : i32, i32, i32
  }
  func.func @transform_1(%arg0: i32) -> (i32, i32, i32) {
    %c0_i32 = arith.constant 0 : i32
    %c0_i32_0 = arith.constant 0 : i32
    %c0_i32_1 = arith.constant 0 : i32
    return %arg0, %c0_i32, %c0_i32_0 : i32, i32, i32
  }
  func.func @transform_2(%arg0: i32) -> (i32, i32, i32) {
    %c0_i32 = arith.constant 0 : i32
    %c0_i32_0 = arith.constant 0 : i32
    %c0_i32_1 = arith.constant 0 : i32
    return %arg0, %c0_i32, %c0_i32_0 : i32, i32, i32
  }
  func.func @transform_3(%arg0: i32) -> (i32, i32, i32) {
    %c0_i32 = arith.constant 0 : i32
    %c0_i32_0 = arith.constant 0 : i32
    %c0_i32_1 = arith.constant 0 : i32
    return %arg0, %c0_i32, %c0_i32_0 : i32, i32, i32
  }
  func.func @transform_4(%arg0: i32) -> (i32, i32, i32) {
    %c0_i32 = arith.constant 0 : i32
    %c0_i32_0 = arith.constant 0 : i32
    %c0_i32_1 = arith.constant 0 : i32
    return %arg0, %c0_i32, %c0_i32_0 : i32, i32, i32
  }
  func.func @transform_5(%arg0: i32) -> (i32, i32) {
    %c0_i32 = arith.constant 0 : i32
    %c0_i32_0 = arith.constant 0 : i32
    %c0_i32_1 = arith.constant 0 : i32
    return %c0_i32, %c0_i32_0 : i32, i32
  }
  func.func @transform_6(%arg0: i32) -> (i32, i32) {
    %c0_i32 = arith.constant 0 : i32
    %c0_i32_0 = arith.constant 0 : i32
    %c0_i32_1 = arith.constant 0 : i32
    return %c0_i32, %c0_i32_0 : i32, i32
  }
  func.func @transform_7(%arg0: i32) -> (i32, i32) {
    %c0_i32 = arith.constant 0 : i32
    %c0_i32_0 = arith.constant 0 : i32
    %c0_i32_1 = arith.constant 0 : i32
    return %c0_i32, %c0_i32_0 : i32, i32
  }
  func.func @transform_8(%arg0: i32) -> (i32, i32, i32) {
    %c0_i32 = arith.constant 0 : i32
    %c0_i32_0 = arith.constant 0 : i32
    %c0_i32_1 = arith.constant 0 : i32
    return %arg0, %c0_i32, %c0_i32_0 : i32, i32, i32
  }
}

</mosaic_0001>

<llo_original>
// kernel: tpu_custom_call.1
$region0: #{tpu_custom_call.1}
  #allocation0 [shape = 'u32[]', space=smem, size = 0x4, offset = 0x4, fixed_abs, tag = 'smem constant byte address 0x4 - core index']
  #allocation1 [shape = 'u32[144,128]{1,0:T(1,128)}', space=vmem, size = 0x12000, scoped, tag = 'internal scratch']
  %s0 = inlined_call_operand.vmem [shape: f32[2,8,32], index: 0, kind: input, shape index: {}]
  %s1 = inlined_call_operand.vmem [shape: f32[2,16,32], index: 1, kind: input, shape index: {}]
  %s2 = inlined_call_operand.vmem [shape: f32[2,8,32], index: 2, kind: input, shape index: {}]
  %s3 = inlined_call_operand.vmem [shape: f32[2,16,32], index: 3, kind: input, shape index: {}]
  %s4 = inlined_call_operand.vmem [shape: f32[2,1,64], index: 4, kind: input, shape index: {}]
  %s5 = inlined_call_operand.vmem [shape: bf16[384,32], index: 5, kind: input, shape index: {}]
  %s6 = inlined_call_operand.vmem [shape: f32[15,32], index: 6, kind: input, shape index: {}]
  %s7 = inlined_call_operand.vmem [shape: f32[1,64], index: 7, kind: input, shape index: {}]
  %s8 = inlined_call_operand.hbm [shape: f32[2,8,32], index: 8, kind: output, shape index: {}]
  %s9 = sld [smem:[#allocation0]]
  $region65: #{tpu_custom_call.1} parent=0
    _
  %s11 = ssub.s32 1, %s9
  %s12 = scalar_select 0, %s11, %s9
  $region1: #{tpu_custom_call.1} parent=0
    #allocation2 [shape = 'u8[8192]{0}', space=vmem, size = 0x2000, scoped, tag = 'output window, operand 0']
    #allocation3 [shape = 's32[2]{0}', space=sflag, size = 0x8, scoped, tag = 'scoped memory for tpu_custom_call.1']
    %13 = vsyncpa [#allocation3], 0
    %s14 = scalar_lea.sflag [#allocation3], 1
    %15 = vsyncpa %s14, 0
    loop: start=0, step=1, limit=4
    $region2: #{tpu_custom_call.1} parent=1 // loop_pre_header
      _
    $region3: #{tpu_custom_call.1} parent=1 // loop_header
      %s17 = sphi 0, %s21
      %p18 = scmp.ge.s32.totalorder %s17, 4
      %s27 = sphi 0, %s29
      %s30 = sphi 0, %s27
      %s31 = sphi 0, %s30
      %s47 = sphi 0, %s31
      %s53 = sphi 0, %s55
      %s56 = sphi 0, %s53
      %s57 = sphi 0, %s56
      %s73 = sphi 0, %s57
      %s79 = sphi 0, %s81
      %s82 = sphi 0, %s79
      %s83 = sphi 0, %s82
      %s99 = sphi 0, %s83
      %s105 = sphi 0, %s107
      %s108 = sphi 0, %s105
      %s109 = sphi 0, %s108
      %s125 = sphi 0, %s109
      %s131 = sphi 0, %s133
      %s134 = sphi 0, %s131
      %s135 = sphi 0, %s134
      %s151 = sphi 0, %s135
      %s155 = sphi 0, %s155
      %s157 = sphi 0, %s155
      %s158 = sphi 0, %s157
      %s172 = sphi 0, %s158
      %s176 = sphi 0, %s176
      %s178 = sphi 0, %s176
      %s179 = sphi 0, %s178
      %s193 = sphi 0, %s179
      %s197 = sphi 0, %s197
      %s199 = sphi 0, %s197
      %s200 = sphi 0, %s199
      %s214 = sphi 0, %s200
      %s220 = sphi 0, %s222
      %s223 = sphi 0, %s220
      %s224 = sphi 0, %s223
      %s240 = sphi 0, %s224
    $region4: #{tpu_custom_call.1} parent=1 // loop_header_branch
      %20 = sbr.rel (%p18) target = $region8
    $region5: #{tpu_custom_call.1} parent=1 // loop_body
      %s22 = ssub.s32 %s17, 1
      %s23 = ssub.s32 %s17, 2
      %s24 = sadd.s32 %s17, 1
      %s25 = ssub.s32 %s17, %s24
      %p26 = scmp.eq.s32.totalorder %s25, 0
      %s28 = sadd.s32 %s27, 1
      %s29 = scalar_select %p26, %s27, %s28
      %p32 = pneg %p26
      %p33 = scmp.eq.s32.totalorder %s17, 1
      %p34 = por %p32, %p33
      %p35 = scmp.ne.s32.totalorder %s27, %s30
      %p36 = scmp.eq.s32.totalorder %s17, 0
      %p37 = por %p35, %p36
      %p38 = scmp.ne.s32.totalorder %s27, %s30
      %p39 = scmp.eq.s32.totalorder %s22, 1
      %p40 = por %p38, %p39
      %p41 = scmp.ne.s32.totalorder %s30, %s31
      %p42 = scmp.eq.s32.totalorder %s22, 0
      %p43 = por %p41, %p42
      %p44 = scmp.ne.s32.totalorder %s30, %s31
      %p45 = scmp.eq.s32.totalorder %s23, 1
      %p46 = por %p44, %p45
      %p48 = scmp.ne.s32.totalorder %s31, %s47
      %p49 = scmp.eq.s32.totalorder %s23, 0
      %p50 = por %p48, %p49
      %s51 = ssub.s32 %s17, %s24
      %p52 = scmp.eq.s32.totalorder %s51, 0
      %s54 = sadd.s32 %s53, 1
      %s55 = scalar_select %p52, %s53, %s54
      %p58 = pneg %p52
      %p59 = scmp.eq.s32.totalorder %s17, 1
      %p60 = por %p58, %p59
      %p61 = scmp.ne.s32.totalorder %s53, %s56
      %p62 = scmp.eq.s32.totalorder %s17, 0
      %p63 = por %p61, %p62
      %p64 = scmp.ne.s32.totalorder %s53, %s56
      %p65 = scmp.eq.s32.totalorder %s22, 1
      %p66 = por %p64, %p65
      %p67 = scmp.ne.s32.totalorder %s56, %s57
      %p68 = scmp.eq.s32.totalorder %s22, 0
      %p69 = por %p67, %p68
      %p70 = scmp.ne.s32.totalorder %s56, %s57
      %p71 = scmp.eq.s32.totalorder %s23, 1
      %p72 = por %p70, %p71
      %p74 = scmp.ne.s32.totalorder %s57, %s73
      %p75 = scmp.eq.s32.totalorder %s23, 0
      %p76 = por %p74, %p75
      %s77 = ssub.s32 %s17, %s24
      %p78 = scmp.eq.s32.totalorder %s77, 0
      %s80 = sadd.s32 %s79, 1
      %s81 = scalar_select %p78, %s79, %s80
      %p84 = pneg %p78
      %p85 = scmp.eq.s32.totalorder %s17, 1
      %p86 = por %p84, %p85
      %p87 = scmp.ne.s32.totalorder %s79, %s82
      %p88 = scmp.eq.s32.totalorder %s17, 0
      %p89 = por %p87, %p88
      %p90 = scmp.ne.s32.totalorder %s79, %s82
      %p91 = scmp.eq.s32.totalorder %s22, 1
      %p92 = por %p90, %p91
      %p93 = scmp.ne.s32.totalorder %s82, %s83
      %p94 = scmp.eq.s32.totalorder %s22, 0
      %p95 = por %p93, %p94
      %p96 = scmp.ne.s32.totalorder %s82, %s83
      %p97 = scmp.eq.s32.totalorder %s23, 1
      %p98 = por %p96, %p97
      %p100 = scmp.ne.s32.totalorder %s83, %s99
      %p101 = scmp.eq.s32.totalorder %s23, 0
      %p102 = por %p100, %p101
      %s103 = ssub.s32 %s17, %s24
      %p104 = scmp.eq.s32.totalorder %s103, 0
      %s106 = sadd.s32 %s105, 1
      %s107 = scalar_select %p104, %s105, %s106
      %p110 = pneg %p104
      %p111 = scmp.eq.s32.totalorder %s17, 1
      %p112 = por %p110, %p111
      %p113 = scmp.ne.s32.totalorder %s105, %s108
      %p114 = scmp.eq.s32.totalorder %s17, 0
      %p115 = por %p113, %p114
      %p116 = scmp.ne.s32.totalorder %s105, %s108
      %p117 = scmp.eq.s32.totalorder %s22, 1
      %p118 = por %p116, %p117
      %p119 = scmp.ne.s32.totalorder %s108, %s109
      %p120 = scmp.eq.s32.totalorder %s22, 0
      %p121 = por %p119, %p120
      %p122 = scmp.ne.s32.totalorder %s108, %s109
      %p123 = scmp.eq.s32.totalorder %s23, 1
      %p124 = por %p122, %p123
      %p126 = scmp.ne.s32.totalorder %s109, %s125
      %p127 = scmp.eq.s32.totalorder %s23, 0
      %p128 = por %p126, %p127
      %s129 = ssub.s32 %s17, %s24
      %p130 = scmp.eq.s32.totalorder %s129, 0
      %s132 = sadd.s32 %s131, 1
      %s133 = scalar_select %p130, %s131, %s132
      %p136 = pneg %p130
      %p137 = scmp.eq.s32.totalorder %s17, 1
      %p138 = por %p136, %p137
      %p139 = scmp.ne.s32.totalorder %s131, %s134
      %p140 = scmp.eq.s32.totalorder %s17, 0
      %p141 = por %p139, %p140
      %p142 = scmp.ne.s32.totalorder %s131, %s134
      %p143 = scmp.eq.s32.totalorder %s22, 1
      %p144 = por %p142, %p143
      %p145 = scmp.ne.s32.totalorder %s134, %s135
      %p146 = scmp.eq.s32.totalorder %s22, 0
      %p147 = por %p145, %p146
      %p148 = scmp.ne.s32.totalorder %s134, %s135
      %p149 = scmp.eq.s32.totalorder %s23, 1
      %p150 = por %p148, %p149
      %p152 = scmp.ne.s32.totalorder %s135, %s151
      %p153 = scmp.eq.s32.totalorder %s23, 0
      %p154 = por %p152, %p153
      %s156 = sadd.s32 %s155, 1
      %p159 = scmp.eq.s32.totalorder %s17, 1
      %p160 = scmp.ne.s32.totalorder %s155, %s157
      %p161 = scmp.eq.s32.totalorder %s17, 0
      %p162 = por %p160, %p161
      %p163 = scmp.ne.s32.totalorder %s155, %s157
      %p164 = scmp.eq.s32.totalorder %s22, 1
      %p165 = por %p163, %p164
      %p166 = scmp.ne.s32.totalorder %s157, %s158
      %p167 = scmp.eq.s32.totalorder %s22, 0
      %p168 = por %p166, %p167
      %p169 = scmp.ne.s32.totalorder %s157, %s158
      %p170 = scmp.eq.s32.totalorder %s23, 1
      %p171 = por %p169, %p170
      %p173 = scmp.ne.s32.totalorder %s158, %s172
      %p174 = scmp.eq.s32.totalorder %s23, 0
      %p175 = por %p173, %p174
      %s177 = sadd.s32 %s176, 1
      %p180 = scmp.eq.s32.totalorder %s17, 1
      %p181 = scmp.ne.s32.totalorder %s176, %s178
      %p182 = scmp.eq.s32.totalorder %s17, 0
      %p183 = por %p181, %p182
      %p184 = scmp.ne.s32.totalorder %s176, %s178
      %p185 = scmp.eq.s32.totalorder %s22, 1
      %p186 = por %p184, %p185
      %p187 = scmp.ne.s32.totalorder %s178, %s179
      %p188 = scmp.eq.s32.totalorder %s22, 0
      %p189 = por %p187, %p188
      %p190 = scmp.ne.s32.totalorder %s178, %s179
      %p191 = scmp.eq.s32.totalorder %s23, 1
      %p192 = por %p190, %p191
      %p194 = scmp.ne.s32.totalorder %s179, %s193
      %p195 = scmp.eq.s32.totalorder %s23, 0
      %p196 = por %p194, %p195
      %s198 = sadd.s32 %s197, 1
      %p201 = scmp.eq.s32.totalorder %s17, 1
      %p202 = scmp.ne.s32.totalorder %s197, %s199
      %p203 = scmp.eq.s32.totalorder %s17, 0
      %p204 = por %p202, %p203
      %p205 = scmp.ne.s32.totalorder %s197, %s199
      %p206 = scmp.eq.s32.totalorder %s22, 1
      %p207 = por %p205, %p206
      %p208 = scmp.ne.s32.totalorder %s199, %s200
      %p209 = scmp.eq.s32.totalorder %s22, 0
      %p210 = por %p208, %p209
      %p211 = scmp.ne.s32.totalorder %s199, %s200
      %p212 = scmp.eq.s32.totalorder %s23, 1
      %p213 = por %p211, %p212
      %p215 = scmp.ne.s32.totalorder %s200, %s214
      %p216 = scmp.eq.s32.totalorder %s23, 0
      %p217 = por %p215, %p216
      %s218 = ssub.s32 %s17, %s24
      %p219 = scmp.eq.s32.totalorder %s218, 0
      %s221 = sadd.s32 %s220, 1
      %s222 = scalar_select %p219, %s220, %s221
      %p225 = pneg %p219
      %p226 = scmp.eq.s32.totalorder %s17, 1
      %p227 = por %p225, %p226
      %p228 = scmp.ne.s32.totalorder %s220, %s223
      %p229 = scmp.eq.s32.totalorder %s17, 0
      %p230 = por %p228, %p229
      %p231 = scmp.ne.s32.totalorder %s220, %s223
      %p232 = scmp.eq.s32.totalorder %s22, 1
      %p233 = por %p231, %p232
      %p234 = scmp.ne.s32.totalorder %s223, %s224
      %p235 = scmp.eq.s32.totalorder %s22, 0
      %p236 = por %p234, %p235
      %p237 = scmp.ne.s32.totalorder %s223, %s224
      %p238 = scmp.eq.s32.totalorder %s23, 1
      %p239 = por %p237, %p238
      %p241 = scmp.ne.s32.totalorder %s224, %s240
      %p242 = scmp.eq.s32.totalorder %s23, 0
      %p243 = por %p241, %p242
      %p244 = scmp.le.s32.totalorder 1, %s17
      %p245 = scmp.lt.s32.totalorder %s17, 3
      %p246 = pnand %p244, %p245
      %p247 = pneg %p246
      // Predicated region
      $region9: #{tpu_custom_call.1} parent=5 // pred_check
        _
      $region10: #{tpu_custom_call.1} parent=5 // pred_check_branch
        %249 = sbr.rel (%p246) target = $region12
      $region11: #{tpu_custom_call.1} parent=5 // pred_region
        %s250 = ssub.s32 %s17, 1
        // Predicated region
        $region13: #{tpu_custom_call.1} parent=11 // pred_check
          %p251 = pneg %p168
        $region14: #{tpu_custom_call.1} parent=11 // pred_check_branch
          %253 = sbr.rel (%p251) target = $region16
        $region15: #{tpu_custom_call.1} parent=11 // pred_region
          _
        $region16: #{tpu_custom_call.1} parent=11 // pred_fallthru
          _
        // Predicated region
        $region17: #{tpu_custom_call.1} parent=11 // pred_check
          %p254 = pneg %p189
        $region18: #{tpu_custom_call.1} parent=11 // pred_check_branch
          %256 = sbr.rel (%p254) target = $region20
        $region19: #{tpu_custom_call.1} parent=11 // pred_region
          _
        $region20: #{tpu_custom_call.1} parent=11 // pred_fallthru
          _
        // Predicated region
        $region21: #{tpu_custom_call.1} parent=11 // pred_check
          %p257 = pneg %p210
        $region22: #{tpu_custom_call.1} parent=11 // pred_check_branch
          %259 = sbr.rel (%p257) target = $region24
        $region23: #{tpu_custom_call.1} parent=11 // pred_region
          _
        $region24: #{tpu_custom_call.1} parent=11 // pred_fallthru
          _
      $region12: #{tpu_custom_call.1} parent=5 // pred_fallthru
        _
      %p260 = scmp.lt.s32.totalorder %s17, 2
      // Predicated region
      $region25: #{tpu_custom_call.1} parent=5 // pred_check
        %p261 = pneg %p260
      $region26: #{tpu_custom_call.1} parent=5 // pred_check_branch
        %263 = sbr.rel (%p261) target = $region28
      $region27: #{tpu_custom_call.1} parent=5 // pred_region
        // Predicated region
        $region29: #{tpu_custom_call.1} parent=27 // pred_check
          %p264 = pneg %p37
        $region30: #{tpu_custom_call.1} parent=27 // pred_check_branch
          %266 = sbr.rel (%p264) target = $region32
        $region31: #{tpu_custom_call.1} parent=27 // pred_region
          %p267 = scmp.lt.s32.totalorder %s17, 1
          %s268 = scalar_select %p267, %s17, 1
          %s269 = smul.addr %s268, 8
          %s270 = scalar_lea.vmem %s0, %s269
        $region32: #{tpu_custom_call.1} parent=27 // pred_fallthru
          _
        // Predicated region
        $region33: #{tpu_custom_call.1} parent=27 // pred_check
          %p271 = pneg %p63
        $region34: #{tpu_custom_call.1} parent=27 // pred_check_branch
          %273 = sbr.rel (%p271) target = $region36
        $region35: #{tpu_custom_call.1} parent=27 // pred_region
          %p274 = scmp.lt.s32.totalorder %s17, 1
          %s275 = scalar_select %p274, %s17, 1
          %s276 = smul.addr %s275, 2
          %s277 = smul.addr %s276, 8
          %s278 = scalar_lea.vmem %s1, %s277
        $region36: #{tpu_custom_call.1} parent=27 // pred_fallthru
          _
        // Predicated region
        $region37: #{tpu_custom_call.1} parent=27 // pred_check
          %p279 = pneg %p89
        $region38: #{tpu_custom_call.1} parent=27 // pred_check_branch
          %281 = sbr.rel (%p279) target = $region40
        $region39: #{tpu_custom_call.1} parent=27 // pred_region
          %p282 = scmp.lt.s32.totalorder %s17, 1
          %s283 = scalar_select %p282, %s17, 1
          %s284 = smul.addr %s283, 8
          %s285 = scalar_lea.vmem %s2, %s284
        $region40: #{tpu_custom_call.1} parent=27 // pred_fallthru
          _
        // Predicated region
        $region41: #{tpu_custom_call.1} parent=27 // pred_check
          %p286 = pneg %p115
        $region42: #{tpu_custom_call.1} parent=27 // pred_check_branch
          %288 = sbr.rel (%p286) target = $region44
        $region43: #{tpu_custom_call.1} parent=27 // pred_region
          %p289 = scmp.lt.s32.totalorder %s17, 1
          %s290 = scalar_select %p289, %s17, 1
          %s291 = smul.addr %s290, 2
          %s292 = smul.addr %s291, 8
          %s293 = scalar_lea.vmem %s3, %s292
        $region44: #{tpu_custom_call.1} parent=27 // pred_fallthru
          _
        // Predicated region
        $region45: #{tpu_custom_call.1} parent=27 // pred_check
          %p294 = pneg %p141
        $region46: #{tpu_custom_call.1} parent=27 // pred_check_branch
          %296 = sbr.rel (%p294) target = $region48
        $region47: #{tpu_custom_call.1} parent=27 // pred_region
          %p297 = scmp.lt.s32.totalorder %s17, 1
          %s298 = scalar_select %p297, %s17, 1
          %s299 = scalar_lea.vmem %s4, %s298
        $region48: #{tpu_custom_call.1} parent=27 // pred_fallthru
          _
      $region28: #{tpu_custom_call.1} parent=5 // pred_fallthru
        _
      %p300 = scmp.le.s32.totalorder 1, %s17
      %p301 = scmp.lt.s32.totalorder %s17, 3
      %p302 = pnand %p300, %p301
      %p303 = pneg %p302
      // Predicated region
      $region49: #{tpu_custom_call.1} parent=5 // pred_check
        _
      $region50: #{tpu_custom_call.1} parent=5 // pred_check_branch
        %305 = sbr.rel (%p302) target = $region52
      $region51: #{tpu_custom_call.1} parent=5 // pred_region
        %s306 = ssub.s32 %s17, 1
        %p307 = scmp.lt.s32.totalorder %s22, 1
        %s308 = scalar_select %p307, %s22, 1
        %s309 = smul.addr %s308, 8
        %s310 = scalar_lea.vmem %s0, %s309
        %p311 = pneg %p43
        %p312 = pneg %p40
        %p313 = scmp.lt.s32.totalorder %s22, 1
        %s314 = scalar_select %p313, %s22, 1
        %s315 = smul.addr %s314, 2
        %s316 = smul.addr %s315, 8
        %s317 = scalar_lea.vmem %s1, %s316
        %p318 = pneg %p69
        %p319 = pneg %p66
        %p320 = scmp.lt.s32.totalorder %s22, 1
        %s321 = scalar_select %p320, %s22, 1
        %s322 = smul.addr %s321, 8
        %s323 = scalar_lea.vmem %s2, %s322
        %p324 = pneg %p95
        %p325 = pneg %p92
        %p326 = scmp.lt.s32.totalorder %s22, 1
        %s327 = scalar_select %p326, %s22, 1
        %s328 = smul.addr %s327, 2
        %s329 = smul.addr %s328, 8
        %s330 = scalar_lea.vmem %s3, %s329
        %p331 = pneg %p121
        %p332 = pneg %p118
        %p333 = scmp.lt.s32.totalorder %s22, 1
        %s334 = scalar_select %p333, %s22, 1
        %s335 = scalar_lea.vmem %s4, %s334
        %p336 = pneg %p147
        %p337 = pneg %p144
        %p338 = pneg %p168
        %p339 = pneg %p165
        %p340 = pneg %p189
        %p341 = pneg %p186
        %p342 = pneg %p210
        %p343 = pneg %p207
        %p344 = pneg %p236
        %p345 = pneg %p233
        %s346 = sand.u32 %s223, 1
        %s347 = scalar_lea.sflag [#allocation3], %s346
        %s348 = sand.u32 %s223, 1
        %s349 = smul.addr %s348, 8
        %s350 = scalar_lea.vmem [#allocation2], %s349
        %p351 = scmp.lt.s32.totalorder %s22, 1
        %s352 = scalar_select %p351, %s22, 1
        %s353 = smul.addr %s352, 8
        %s354 = scalar_lea.vmem %s0, %s353
        %p355 = scmp.lt.s32.totalorder %s22, 1
        %s356 = scalar_select %p355, %s22, 1
        %s357 = smul.addr %s356, 2
        %s358 = smul.addr %s357, 8
        %s359 = scalar_lea.vmem %s1, %s358
        %p360 = scmp.lt.s32.totalorder %s22, 1
        %s361 = scalar_select %p360, %s22, 1
        %s362 = smul.addr %s361, 8
        %s363 = scalar_lea.vmem %s2, %s362
        %p364 = scmp.lt.s32.totalorder %s22, 1
        %s365 = scalar_select %p364, %s22, 1
        %s366 = smul.addr %s365, 2
        %s367 = smul.addr %s366, 8
        %s368 = scalar_lea.vmem %s3, %s367
        %p369 = scmp.lt.s32.totalorder %s22, 1
        %s370 = scalar_select %p369, %s22, 1
        %s371 = scalar_lea.vmem %s4, %s370
        %v373 = vld [vmem:[%s354] sm:$0xff]
        %v374 = vld [vmem:[%s359] sm:$0xff]
        %v375 = vld [vmem:[%s359 + $0x8] sm:$0xff]
        %v376 = vld [vmem:[%s363] sm:$0xff]
        %v377 = vld [vmem:[%s368] sm:$0xff]
        %v378 = vld [vmem:[%s368 + $0x8] sm:$0xff]
        %v379 = vld [vmem:[%s371] sm:$0x1]
        %v380 = vld [vmem:[%s5] sm:$0xf]
        %v381 = vld [vmem:[%s5 + $0x4] sm:$0xf]
        %v382 = vld [vmem:[%s5 + $0x8] sm:$0xf]
        %v383 = vld [vmem:[%s5 + $0xc] sm:$0xf]
        %v384 = vld [vmem:[%s5 + $0x10] sm:$0xf]
        %v385 = vld [vmem:[%s5 + $0x14] sm:$0xf]
        %v386 = vld [vmem:[%s5 + $0x18] sm:$0xf]
        %v387 = vld [vmem:[%s5 + $0x1c] sm:$0xf]
        %v388 = vld [vmem:[%s5 + $0x20] sm:$0xf]
        %v389 = vld [vmem:[%s5 + $0x24] sm:$0xf]
        %v390 = vld [vmem:[%s5 + $0x28] sm:$0xf]
        %v391 = vld [vmem:[%s5 + $0x2c] sm:$0xf]
        %v392 = vld [vmem:[%s5 + $0x30] sm:$0xf]
        %v393 = vld [vmem:[%s5 + $0x34] sm:$0xf]
        %v394 = vld [vmem:[%s5 + $0x38] sm:$0xf]
        %v395 = vld [vmem:[%s5 + $0x3c] sm:$0xf]
        %v396 = vld [vmem:[%s5 + $0x40] sm:$0xf]
        %v397 = vld [vmem:[%s5 + $0x44] sm:$0xf]
        %v398 = vld [vmem:[%s5 + $0x48] sm:$0xf]
        %v399 = vld [vmem:[%s5 + $0x4c] sm:$0xf]
        %v400 = vld [vmem:[%s5 + $0x50] sm:$0xf]
        %v401 = vld [vmem:[%s5 + $0x54] sm:$0xf]
        %v402 = vld [vmem:[%s5 + $0x58] sm:$0xf]
        %v403 = vld [vmem:[%s5 + $0x5c] sm:$0xf]
        %v404 = vld [vmem:[%s5 + $0x60] sm:$0xf]
        %v405 = vld [vmem:[%s5 + $0x64] sm:$0xf]
        %v406 = vld [vmem:[%s5 + $0x68] sm:$0xf]
        %v407 = vld [vmem:[%s5 + $0x6c] sm:$0xf]
        %v408 = vld [vmem:[%s5 + $0x70] sm:$0xf]
        %v409 = vld [vmem:[%s5 + $0x74] sm:$0xf]
        %v410 = vld [vmem:[%s5 + $0x78] sm:$0xf]
        %v411 = vld [vmem:[%s5 + $0x7c] sm:$0xf]
        %v412 = vld [vmem:[%s5 + $0x80] sm:$0xf]
        %v413 = vld [vmem:[%s5 + $0x84] sm:$0xf]
        %v414 = vld [vmem:[%s5 + $0x88] sm:$0xf]
        %v415 = vld [vmem:[%s5 + $0x8c] sm:$0xf]
        %v416 = vld [vmem:[%s5 + $0x90] sm:$0xf]
        %v417 = vld [vmem:[%s5 + $0x94] sm:$0xf]
        %v418 = vld [vmem:[%s5 + $0x98] sm:$0xf]
        %v419 = vld [vmem:[%s5 + $0x9c] sm:$0xf]
        %v420 = vld [vmem:[%s5 + $0xa0] sm:$0xf]
        %v421 = vld [vmem:[%s5 + $0xa4] sm:$0xf]
        %v422 = vld [vmem:[%s5 + $0xa8] sm:$0xf]
        %v423 = vld [vmem:[%s5 + $0xac] sm:$0xf]
        %v424 = vld [vmem:[%s5 + $0xb0] sm:$0xf]
        %v425 = vld [vmem:[%s5 + $0xb4] sm:$0xf]
        %v426 = vld [vmem:[%s5 + $0xb8] sm:$0xf]
        %v427 = vld [vmem:[%s5 + $0xbc] sm:$0xf]
        %v428 = vld [vmem:[%s6] sm:$0xff]
        %v429 = vld [vmem:[%s6 + $0x8] sm:$0x7f]
        %v430 = vld [vmem:[%s7] sm:$0x1]
        %v431 = vadd.f32 %v373, %v376
        %v432 = vpack.c.bf16 %v431, %v431
        %v441 = vunpack.c.l.b16 %v380
        %v442 = vunpack.c.l.b16 %v381
        %v443 = vunpack.c.l.b16 %v382
        %v444 = vunpack.c.l.b16 %v383
        %v445 = vunpack.c.l.b16 %v384
        %v446 = vunpack.c.l.b16 %v385
        %v447 = vunpack.c.l.b16 %v386
        %v448 = vunpack.c.l.b16 %v387
        %v449 = vpack.c.b16 %v442, %v441
        %v450 = vpack.c.b16 %v444, %v443
        %v451 = vpack.c.b16 %v446, %v445
        %v452 = vpack.c.b16 %v448, %v447
        %vm453 = vcmask 261120
        %v455 = vsel %vm453, %v432, 0
        %v458 = vsel %vm453, %v449, 0
        %v461 = vsel %vm453, %v450, 0
        %v464 = vsel %vm453, %v451, 0
        %v467 = vsel %vm453, %v452, 0
        %469 = vmatprep.subr.bf16.mxu0 0
        %470 = vmatpush1.bf16.xpose.msra.mxu0 %v458
        %471 = vmatprep.subr.bf16.mxu0 0
        %472 = vmatpush1.bf16.xpose.msra.mxu0 %v461
        %473 = vmatprep.subr.bf16.mxu0 0
        %474 = vmatpush1.bf16.xpose.msra.mxu0 %v464
        %475 = vmatprep.subr.bf16.mxu0 0
        %476 = vmatpush1.bf16.xpose.msra.mxu0 %v467
        %477 = vmatprep.subr.bf16.mxu0 0
        %478 = vmatpush1.bf16.xpose.msra.mxu0 0
        %479 = vmatprep.subr.bf16.mxu0 0
        %480 = vmatpush1.bf16.xpose.msra.mxu0 0
        %481 = vmatprep.subr.bf16.mxu0 0
        %482 = vmatpush1.bf16.xpose.msra.mxu0 0
        %483 = vmatprep.subr.bf16.mxu0 0
        %484 = vmatpush1.bf16.xpose.msra.mxu0 0
        %485 = vmatprep.subr.bf16.mxu0 0
        %486 = vmatpush1.bf16.xpose.msra.mxu0 0
        %487 = vmatprep.subr.bf16.mxu0 0
        %488 = vmatpush1.bf16.xpose.msra.mxu0 0
        %489 = vmatprep.subr.bf16.mxu0 0
        %490 = vmatpush1.bf16.xpose.msra.mxu0 0
        %491 = vmatprep.subr.bf16.mxu0 0
        %492 = vmatpush1.bf16.xpose.msra.mxu0 0
        %493 = vmatprep.subr.bf16.mxu0 0
        %494 = vmatpush1.bf16.xpose.msra.mxu0 0
        %495 = vmatprep.subr.bf16.mxu0 0
        %496 = vmatpush1.bf16.xpose.msra.mxu0 0
        %497 = vmatprep.subr.bf16.mxu0 0
        %498 = vmatpush1.bf16.xpose.msra.mxu0 0
        %499 = vmatprep.subr.bf16.mxu0 0
        %500 = vmatpush1.bf16.xpose.msra.mxu0 0
        %501 = vmatprep.mubr.bf16.mxu0 0
        %502 = vmatmul.mubr.bf16.gmra.mrb[0].mxu0 %v455
        %v503 = vpop.f32.mrb[0].mxu0
        %v504 = vadd.f32 0.0, %v503
        %v505 = vpop.f32.mrb[0].mxu0
        %v506 = vpop.f32.mrb[0].mxu0
        %v507 = vpop.f32.mrb[0].mxu0
        %508 = vdwg.mxu0
        %v509 = vlaneseq
        %v510 = vshrl.u32 %v509, 7
        %v511 = vsub.s32 0, %v510
        %v512 = vrot.slane %v428, %v511
        %v513 = vadd.f32 %v504, %v512
        %v514 = vmul.f32 %v513, 0.35355338
        %v515 = vlaneseq
        %v516 = vshrl.u32 %v515, 7
        %v517 = vsub.s32 1, %v516
        %v518 = vrot.slane %v428, %v517
        %520 = vrot.lane.b32.xlu0 %v518, 32
        %v521 = vpop.permute.xlu0 %520
        %v523 = vadd.f32 %v504, %v521
        %v524 = vpack.c.bf16 %v373, %v373
        %v525 = vlaneseq
        %v526 = vshrl.u32 %v525, 7
        %v527 = vsub.s32 2, %v526
        %v528 = vrot.slane %v428, %v527
        %v533 = vunpack.c.l.b16 %v388
        %v534 = vunpack.c.l.b16 %v389
        %v535 = vunpack.c.l.b16 %v390
        %v536 = vunpack.c.l.b16 %v391
        %v537 = vpack.c.b16 %v534, %v533
        %v538 = vpack.c.b16 %v536, %v535
        %v540 = vsel %vm453, %v524, 0
        %v543 = vsel %vm453, %v537, 0
        %v546 = vsel %vm453, %v538, 0
        %548 = vmatprep.subr.bf16.mxu0 0
        %549 = vmatpush1.bf16.xpose.msra.mxu0 %v543
        %550 = vmatprep.subr.bf16.mxu0 0
        %551 = vmatpush1.bf16.xpose.msra.mxu0 %v546
        %552 = vmatprep.subr.bf16.mxu0 0
        %553 = vmatpush1.bf16.xpose.msra.mxu0 0
        %554 = vmatprep.subr.bf16.mxu0 0
        %555 = vmatpush1.bf16.xpose.msra.mxu0 0
        %556 = vmatprep.subr.bf16.mxu0 0
        %557 = vmatpush1.bf16.xpose.msra.mxu0 0
        %558 = vmatprep.subr.bf16.mxu0 0
        %559 = vmatpush1.bf16.xpose.msra.mxu0 0
        %560 = vmatprep.subr.bf16.mxu0 0
        %561 = vmatpush1.bf16.xpose.msra.mxu0 0
        %562 = vmatprep.subr.bf16.mxu0 0
        %563 = vmatpush1.bf16.xpose.msra.mxu0 0
        %564 = vmatprep.subr.bf16.mxu0 0
        %565 = vmatpush1.bf16.xpose.msra.mxu0 0
        %566 = vmatprep.subr.bf16.mxu0 0
        %567 = vmatpush1.bf16.xpose.msra.mxu0 0
        %568 = vmatprep.subr.bf16.mxu0 0
        %569 = vmatpush1.bf16.xpose.msra.mxu0 0
        %570 = vmatprep.subr.bf16.mxu0 0
        %571 = vmatpush1.bf16.xpose.msra.mxu0 0
        %572 = vmatprep.subr.bf16.mxu0 0
        %573 = vmatpush1.bf16.xpose.msra.mxu0 0
        %574 = vmatprep.subr.bf16.mxu0 0
        %575 = vmatpush1.bf16.xpose.msra.mxu0 0
        %576 = vmatprep.subr.bf16.mxu0 0
        %577 = vmatpush1.bf16.xpose.msra.mxu0 0
        %578 = vmatprep.subr.bf16.mxu0 0
        %579 = vmatpush1.bf16.xpose.msra.mxu0 0
        %580 = vmatprep.mubr.bf16.mxu0 0
        %581 = vmatmul.mubr.bf16.gmra.mrb[0].mxu0 %v540
        %v582 = vpop.f32.mrb[0].mxu0
        %v583 = vadd.f32 %v528, %v582
        %v584 = vpop.f32.mrb[0].mxu0
        %v585 = vpop.f32.mrb[0].mxu0
        %v586 = vpop.f32.mrb[0].mxu0
        %587 = vdwg.mxu0
        %v588 = vlaneseq
        %v589 = vshrl.u32 %v588, 7
        %v590 = vadd.s32 %v589, 8
        %v591 = vadd.s32 %v589, 16
        %v592 = vadd.s32 %v589, 24
        %v593 = vcvt.s32.f32 %v589
        %v594 = vcvt.s32.f32 %v590
        %v595 = vcvt.s32.f32 %v591
        %v596 = vcvt.s32.f32 %v592
        %v597 = vlaneseq
        %v598 = vand.u32 %v597, 127
        %v599 = vcvt.s32.f32 %v598
        %v600 = vadd.f32 %v593, 0.5
        %v601 = vadd.f32 %v594, 0.5
        %v602 = vadd.f32 %v595, 0.5
        %v603 = vadd.f32 %v596, 0.5
        %v604 = vmul.f32 %v600, 0.125
        %v605 = vmul.f32 %v601, 0.125
        %v606 = vmul.f32 %v602, 0.125
        %v607 = vmul.f32 %v603, 0.125
        %v608 = vfloor.f32 %v604
        %v609 = vfloor.f32 %v605
        %v610 = vfloor.f32 %v606
        %v611 = vfloor.f32 %v607
        %v612 = vadd.f32 %v599, 0.5
        %v613 = vmul.f32 %v612, 0.125
        %v614 = vfloor.f32 %v613
        %vm615 = vcmp.eq.f32.partialorder %v608, %v614
        %vm616 = vcmp.eq.f32.partialorder %v609, %v614
        %vm617 = vcmp.eq.f32.partialorder %v610, %v614
        %vm618 = vcmp.eq.f32.partialorder %v611, %v614
        %v619 = vsel %vm615, 1, 0
        %v620 = vsel %vm616, 1, 0
        %v621 = vsel %vm617, 1, 0
        %v622 = vsel %vm618, 1, 0
        %v623 = vcvt.s32.f32 %v619
        %v624 = vcvt.s32.f32 %v620
        %v625 = vcvt.s32.f32 %v621
        %v626 = vcvt.s32.f32 %v622
        %631 = vrot.lane.b32.xlu0 %v623, 32
        %v632 = vpop.permute.xlu0 %631
        %633 = vrot.lane.b32.xlu0 %v624, 32
        %v634 = vpop.permute.xlu0 %633
        %635 = vrot.lane.b32.xlu0 %v625, 32
        %v636 = vpop.permute.xlu0 %635
        %637 = vrot.lane.b32.xlu0 %v626, 32
        %v638 = vpop.permute.xlu0 %637
        %v643 = vmul.f32 %v523, %v632
        %v644 = vmul.f32 %v523, %v634
        %v645 = vmul.f32 %v523, %v636
        %v646 = vmul.f32 %v523, %v638
        %v647 = vmul.f32 %v583, %v623
        %v648 = vmul.f32 %v583, %v624
        %v649 = vmul.f32 %v583, %v625
        %v650 = vmul.f32 %v583, %v626
        %v651 = vpack.c.bf16 %v514, %v514
        %v652 = vpack.c.bf16 %v644, %v643
        %v653 = vpack.c.bf16 %v646, %v645
        %656 = vrot.lane.b32.xlu0 %v652, 96
        %v657 = vpop.permute.xlu0 %656
        %658 = vrot.lane.b32.xlu0 %v653, 96
        %v659 = vpop.permute.xlu0 %658
        %v661 = vsel %vm453, %v651, 0
        %v664 = vsel %vm453, %v657, 0
        %v667 = vsel %vm453, %v659, 0
        %669 = vmatprep.subr.bf16.mxu0 0
        %670 = vmatpush1.bf16.xpose.msra.mxu0 %v664
        %671 = vmatprep.subr.bf16.mxu0 0
        %672 = vmatpush1.bf16.xpose.msra.mxu0 %v667
        %673 = vmatprep.subr.bf16.mxu0 0
        %674 = vmatpush1.bf16.xpose.msra.mxu0 0
        %675 = vmatprep.subr.bf16.mxu0 0
        %676 = vmatpush1.bf16.xpose.msra.mxu0 0
        %677 = vmatprep.subr.bf16.mxu0 0
        %678 = vmatpush1.bf16.xpose.msra.mxu0 0
        %679 = vmatprep.subr.bf16.mxu0 0
        %680 = vmatpush1.bf16.xpose.msra.mxu0 0
        %681 = vmatprep.subr.bf16.mxu0 0
        %682 = vmatpush1.bf16.xpose.msra.mxu0 0
        %683 = vmatprep.subr.bf16.mxu0 0
        %684 = vmatpush1.bf16.xpose.msra.mxu0 0
        %685 = vmatprep.subr.bf16.mxu0 0
        %686 = vmatpush1.bf16.xpose.msra.mxu0 0
        %687 = vmatprep.subr.bf16.mxu0 0
        %688 = vmatpush1.bf16.xpose.msra.mxu0 0
        %689 = vmatprep.subr.bf16.mxu0 0
        %690 = vmatpush1.bf16.xpose.msra.mxu0 0
        %691 = vmatprep.subr.bf16.mxu0 0
        %692 = vmatpush1.bf16.xpose.msra.mxu0 0
        %693 = vmatprep.subr.bf16.mxu0 0
        %694 = vmatpush1.bf16.xpose.msra.mxu0 0
        %695 = vmatprep.subr.bf16.mxu0 0
        %696 = vmatpush1.bf16.xpose.msra.mxu0 0
        %697 = vmatprep.subr.bf16.mxu0 0
        %698 = vmatpush1.bf16.xpose.msra.mxu0 0
        %699 = vmatprep.subr.bf16.mxu0 0
        %700 = vmatpush1.bf16.xpose.msra.mxu0 0
        %701 = vmatprep.mubr.bf16.mxu0 0
        %702 = vmatmul.mubr.bf16.gmra.mrb[0].mxu0 %v661
        %v703 = vpop.f32.mrb[0].mxu0
        %v704 = vadd.f32 0.0, %v703
        %v705 = vpop.f32.mrb[0].mxu0
        %v706 = vpop.f32.mrb[0].mxu0
        %v707 = vpop.f32.mrb[0].mxu0
        %708 = vdwg.mxu0
        %v709 = vsel %vm453, %v704, -inf
        %710 = vmax.xlane.f32.xlu0 %v709
        %v711 = vpop.xlane.xlu0 %710
        %v712 = vsub.f32 %v704, %v711
        %v713 = vmax.f32 %v712, -60.0
        %v714 = vmul.f32 %v713, 1.442695
        %v715 = vpow.pop %v714
        %v717 = vsel %vm453, %v715, 0
        %719 = vmatprep.subr.mxu0 0.0
        %720 = vmatpush1.msra.mxu0 %v623
        %721 = vmatprep.subr.mxu0 0.0
        %722 = vmatpush1.msra.mxu0 %v624
        %723 = vmatprep.subr.mxu0 0.0
        %724 = vmatpush1.msra.mxu0 %v625
        %725 = vmatprep.subr.mxu0 0.0
        %726 = vmatpush1.msra.mxu0 %v626
        %727 = vmatprep.subr.mxu0 0.0
        %728 = vmatpush1.msra.mxu0 0.0
        %729 = vmatprep.subr.mxu0 0.0
        %730 = vmatpush1.msra.mxu0 0.0
        %731 = vmatprep.subr.mxu0 0.0
        %732 = vmatpush1.msra.mxu0 0.0
        %733 = vmatprep.subr.mxu0 0.0
        %734 = vmatpush1.msra.mxu0 0.0
        %735 = vmatprep.subr.mxu0 0.0
        %736 = vmatpush1.msra.mxu0 0.0
        %737 = vmatprep.subr.mxu0 0.0
        %738 = vmatpush1.msra.mxu0 0.0
        %739 = vmatprep.subr.mxu0 0.0
        %740 = vmatpush1.msra.mxu0 0.0
        %741 = vmatprep.subr.mxu0 0.0
        %742 = vmatpush1.msra.mxu0 0.0
        %743 = vmatprep.subr.mxu0 0.0
        %744 = vmatpush1.msra.mxu0 0.0
        %745 = vmatprep.subr.mxu0 0.0
        %746 = vmatpush1.msra.mxu0 0.0
        %747 = vmatprep.subr.mxu0 0.0
        %748 = vmatpush1.msra.mxu0 0.0
        %749 = vmatprep.subr.mxu0 0.0
        %750 = vmatpush1.msra.mxu0 0.0
        %751 = vmatprep.subr.mxu0 0.0
        %752 = vmatpush1.msra.mxu0 0.0
        %753 = vmatprep.subr.mxu0 0.0
        %754 = vmatpush1.msra.mxu0 0.0
        %755 = vmatprep.subr.mxu0 0.0
        %756 = vmatpush1.msra.mxu0 0.0
        %757 = vmatprep.subr.mxu0 0.0
        %758 = vmatpush1.msra.mxu0 0.0
        %759 = vmatprep.subr.mxu0 0.0
        %760 = vmatpush1.msra.mxu0 0.0
        %761 = vmatprep.subr.mxu0 0.0
        %762 = vmatpush1.msra.mxu0 0.0
        %763 = vmatprep.subr.mxu0 0.0
        %764 = vmatpush1.msra.mxu0 0.0
        %765 = vmatprep.subr.mxu0 0.0
        %766 = vmatpush1.msra.mxu0 0.0
        %767 = vmatprep.subr.mxu0 0.0
        %768 = vmatpush1.msra.mxu0 0.0
        %769 = vmatprep.subr.mxu0 0.0
        %770 = vmatpush1.msra.mxu0 0.0
        %771 = vmatprep.subr.mxu0 0.0
        %772 = vmatpush1.msra.mxu0 0.0
        %773 = vmatprep.subr.mxu0 0.0
        %774 = vmatpush1.msra.mxu0 0.0
        %775 = vmatprep.subr.mxu0 0.0
        %776 = vmatpush1.msra.mxu0 0.0
        %777 = vmatprep.subr.mxu0 0.0
        %778 = vmatpush1.msra.mxu0 0.0
        %779 = vmatprep.subr.mxu0 0.0
        %780 = vmatpush1.msra.mxu0 0.0
        %781 = vmatprep.subr.mxu0 0.0
        %782 = vmatpush1.msra.mxu0 0.0
        %783 = vmatprep.mubr.f32.mxu0 0.0
        %784 = vmatmul.mubr.f32.gmra.mrb[0].mxu0 %v717
        %v785 = vpop.f32.mrb[0].mxu0
        %v786 = vadd.f32 0.0, %v785
        %v787 = vpop.f32.mrb[0].mxu0
        %788 = vdwg.mxu0
        %v789 = vrcp.pop %v786
        %v790 = vmul.f32 %v715, %v789
        %v791 = vpack.c.bf16 %v790, %v790
        %v792 = vpack.c.bf16 %v648, %v647
        %v793 = vpack.c.bf16 %v650, %v649
        %v795 = vsel %vm453, %v791, 0
        %797 = vmatprep.subr.bf16.mxu0 0
        %798 = vmatpush1.bf16.msra.mxu0 %v792
        %799 = vmatprep.subr.bf16.mxu0 0
        %800 = vmatpush1.bf16.msra.mxu0 %v793
        %801 = vmatprep.subr.bf16.mxu0 0
        %802 = vmatpush1.bf16.msra.mxu0 0
        %803 = vmatprep.subr.bf16.mxu0 0
        %804 = vmatpush1.bf16.msra.mxu0 0
        %805 = vmatprep.subr.bf16.mxu0 0
        %806 = vmatpush1.bf16.msra.mxu0 0
        %807 = vmatprep.subr.bf16.mxu0 0
        %808 = vmatpush1.bf16.msra.mxu0 0
        %809 = vmatprep.subr.bf16.mxu0 0
        %810 = vmatpush1.bf16.msra.mxu0 0
        %811 = vmatprep.subr.bf16.mxu0 0
        %812 = vmatpush1.bf16.msra.mxu0 0
        %813 = vmatprep.subr.bf16.mxu0 0
        %814 = vmatpush1.bf16.msra.mxu0 0
        %815 = vmatprep.subr.bf16.mxu0 0
        %816 = vmatpush1.bf16.msra.mxu0 0
        %817 = vmatprep.subr.bf16.mxu0 0
        %818 = vmatpush1.bf16.msra.mxu0 0
        %819 = vmatprep.subr.bf16.mxu0 0
        %820 = vmatpush1.bf16.msra.mxu0 0
        %821 = vmatprep.subr.bf16.mxu0 0
        %822 = vmatpush1.bf16.msra.mxu0 0
        %823 = vmatprep.subr.bf16.mxu0 0
        %824 = vmatpush1.bf16.msra.mxu0 0
        %825 = vmatprep.subr.bf16.mxu0 0
        %826 = vmatpush1.bf16.msra.mxu0 0
        %827 = vmatprep.subr.bf16.mxu0 0
        %828 = vmatpush1.bf16.msra.mxu0 0
        %829 = vmatprep.mubr.bf16.mxu0 0
        %830 = vmatmul.mubr.bf16.gmra.mrb[0].mxu0 %v795
        %v831 = vpop.f32.mrb[0].mxu0
        %v832 = vadd.f32 0.0, %v831
        %v833 = vpop.f32.mrb[0].mxu0
        %v834 = vpop.f32.mrb[0].mxu0
        %v835 = vpop.f32.mrb[0].mxu0
        %836 = vdwg.mxu0
        %v837 = vpack.c.bf16 %v832, %v832
        %v838 = vlaneseq
        %v839 = vshrl.u32 %v838, 7
        %v840 = vsub.s32 3, %v839
        %v841 = vrot.slane %v428, %v840
        %v846 = vunpack.c.l.b16 %v392
        %v847 = vunpack.c.l.b16 %v393
        %v848 = vunpack.c.l.b16 %v394
        %v849 = vunpack.c.l.b16 %v395
        %v850 = vpack.c.b16 %v847, %v846
        %v851 = vpack.c.b16 %v849, %v848
        %v853 = vsel %vm453, %v837, 0
        %v856 = vsel %vm453, %v850, 0
        %v859 = vsel %vm453, %v851, 0
        %861 = vmatprep.subr.bf16.mxu0 0
        %862 = vmatpush1.bf16.xpose.msra.mxu0 %v856
        %863 = vmatprep.subr.bf16.mxu0 0
        %864 = vmatpush1.bf16.xpose.msra.mxu0 %v859
        %865 = vmatprep.subr.bf16.mxu0 0
        %866 = vmatpush1.bf16.xpose.msra.mxu0 0
        %867 = vmatprep.subr.bf16.mxu0 0
        %868 = vmatpush1.bf16.xpose.msra.mxu0 0
        %869 = vmatprep.subr.bf16.mxu0 0
        %870 = vmatpush1.bf16.xpose.msra.mxu0 0
        %871 = vmatprep.subr.bf16.mxu0 0
        %872 = vmatpush1.bf16.xpose.msra.mxu0 0
        %873 = vmatprep.subr.bf16.mxu0 0
        %874 = vmatpush1.bf16.xpose.msra.mxu0 0
        %875 = vmatprep.subr.bf16.mxu0 0
        %876 = vmatpush1.bf16.xpose.msra.mxu0 0
        %877 = vmatprep.subr.bf16.mxu0 0
        %878 = vmatpush1.bf16.xpose.msra.mxu0 0
        %879 = vmatprep.subr.bf16.mxu0 0
        %880 = vmatpush1.bf16.xpose.msra.mxu0 0
        %881 = vmatprep.subr.bf16.mxu0 0
        %882 = vmatpush1.bf16.xpose.msra.mxu0 0
        %883 = vmatprep.subr.bf16.mxu0 0
        %884 = vmatpush1.bf16.xpose.msra.mxu0 0
        %885 = vmatprep.subr.bf16.mxu0 0
        %886 = vmatpush1.bf16.xpose.msra.mxu0 0
        %887 = vmatprep.subr.bf16.mxu0 0
        %888 = vmatpush1.bf16.xpose.msra.mxu0 0
        %889 = vmatprep.subr.bf16.mxu0 0
        %890 = vmatpush1.bf16.xpose.msra.mxu0 0
        %891 = vmatprep.subr.bf16.mxu0 0
        %892 = vmatpush1.bf16.xpose.msra.mxu0 0
        %893 = vmatprep.mubr.bf16.mxu0 0
        %894 = vmatmul.mubr.bf16.gmra.mrb[0].mxu0 %v853
        %v895 = vpop.f32.mrb[0].mxu0
        %v896 = vadd.f32 %v841, %v895
        %v897 = vpop.f32.mrb[0].mxu0
        %v898 = vpop.f32.mrb[0].mxu0
        %v899 = vpop.f32.mrb[0].mxu0
        %900 = vdwg.mxu0
        %v901 = vadd.f32 %v373, %v896
        %v902 = vsel %vm453, %v901, 0.0
        %903 = vadd.xlane.f32.xlu0 %v902
        %v904 = vpop.xlane.xlu0 %903
        %v905 = vrcp.pop 32.0
        %v906 = vmul.f32 %v904, %v905
        %v907 = vsub.f32 %v901, %v906
        %v908 = vmul.f32 %v907, %v907
        %v909 = vsel %vm453, %v908, 0.0
        %910 = vadd.xlane.f32.xlu0 %v909
        %v911 = vpop.xlane.xlu0 %910
        %v912 = vmul.f32 %v911, %v905
        %v913 = vadd.f32 %v912, 1e-05
        %v914 = vrsqrt.pop %v913
        %v915 = vmul.f32 %v907, %v914
        %v916 = vlaneseq
        %v917 = vshrl.u32 %v916, 7
        %v918 = vsub.s32 1, %v917
        %v919 = vrot.slane %v429, %v918
        %v920 = vmul.f32 %v915, %v919
        %v921 = vlaneseq
        %v922 = vshrl.u32 %v921, 7
        %v923 = vsub.s32 2, %v922
        %v924 = vrot.slane %v429, %v923
        %v925 = vadd.f32 %v920, %v924
        %v926 = vadd.f32 %v925, %v376
        %v927 = vpack.c.bf16 %v926, %v926
        %v928 = vlaneseq
        %v929 = vshrl.u32 %v928, 7
        %v930 = vsub.s32 4, %v929
        %v931 = vrot.slane %v428, %v930
        %v936 = vunpack.c.l.b16 %v396
        %v937 = vunpack.c.l.b16 %v397
        %v938 = vunpack.c.l.b16 %v398
        %v939 = vunpack.c.l.b16 %v399
        %v940 = vpack.c.b16 %v937, %v936
        %v941 = vpack.c.b16 %v939, %v938
        %v943 = vsel %vm453, %v927, 0
        %v946 = vsel %vm453, %v940, 0
        %v949 = vsel %vm453, %v941, 0
        %951 = vmatprep.subr.bf16.mxu0 0
        %952 = vmatpush1.bf16.xpose.msra.mxu0 %v946
        %953 = vmatprep.subr.bf16.mxu0 0
        %954 = vmatpush1.bf16.xpose.msra.mxu0 %v949
        %955 = vmatprep.subr.bf16.mxu0 0
        %956 = vmatpush1.bf16.xpose.msra.mxu0 0
        %957 = vmatprep.subr.bf16.mxu0 0
        %958 = vmatpush1.bf16.xpose.msra.mxu0 0
        %959 = vmatprep.subr.bf16.mxu0 0
        %960 = vmatpush1.bf16.xpose.msra.mxu0 0
        %961 = vmatprep.subr.bf16.mxu0 0
        %962 = vmatpush1.bf16.xpose.msra.mxu0 0
        %963 = vmatprep.subr.bf16.mxu0 0
        %964 = vmatpush1.bf16.xpose.msra.mxu0 0
        %965 = vmatprep.subr.bf16.mxu0 0
        %966 = vmatpush1.bf16.xpose.msra.mxu0 0
        %967 = vmatprep.subr.bf16.mxu0 0
        %968 = vmatpush1.bf16.xpose.msra.mxu0 0
        %969 = vmatprep.subr.bf16.mxu0 0
        %970 = vmatpush1.bf16.xpose.msra.mxu0 0
        %971 = vmatprep.subr.bf16.mxu0 0
        %972 = vmatpush1.bf16.xpose.msra.mxu0 0
        %973 = vmatprep.subr.bf16.mxu0 0
        %974 = vmatpush1.bf16.xpose.msra.mxu0 0
        %975 = vmatprep.subr.bf16.mxu0 0
        %976 = vmatpush1.bf16.xpose.msra.mxu0 0
        %977 = vmatprep.subr.bf16.mxu0 0
        %978 = vmatpush1.bf16.xpose.msra.mxu0 0
        %979 = vmatprep.subr.bf16.mxu0 0
        %980 = vmatpush1.bf16.xpose.msra.mxu0 0
        %981 = vmatprep.subr.bf16.mxu0 0
        %982 = vmatpush1.bf16.xpose.msra.mxu0 0
        %983 = vmatprep.mubr.bf16.mxu0 0
        %984 = vmatmul.mubr.bf16.gmra.mrb[0].mxu0 %v943
        %v985 = vpop.f32.mrb[0].mxu0
        %v986 = vadd.f32 %v931, %v985
        %v987 = vpop.f32.mrb[0].mxu0
        %v988 = vpop.f32.mrb[0].mxu0
        %v989 = vpop.f32.mrb[0].mxu0
        %990 = vdwg.mxu0
        %v991 = vmul.f32 %v986, 0.35355338
        %v992 = vadd.f32 %v374, %v377
        %v993 = vadd.f32 %v375, %v378
        %v994 = vpack.c.bf16 %v993, %v992
        %v995 = vlaneseq
        %v996 = vshrl.u32 %v995, 7
        %v997 = vsub.s32 5, %v996
        %v998 = vrot.slane %v428, %v997
        %v1003 = vunpack.c.l.b16 %v400
        %v1004 = vunpack.c.l.b16 %v401
        %v1005 = vunpack.c.l.b16 %v402
        %v1006 = vunpack.c.l.b16 %v403
        %v1007 = vpack.c.b16 %v1004, %v1003
        %v1008 = vpack.c.b16 %v1006, %v1005
        %v1010 = vsel %vm453, %v994, 0
        %v1013 = vsel %vm453, %v1007, 0
        %v1016 = vsel %vm453, %v1008, 0
        %1018 = vmatprep.subr.bf16.mxu0 0
        %1019 = vmatpush1.bf16.xpose.msra.mxu0 %v1013
        %1020 = vmatprep.subr.bf16.mxu0 0
        %1021 = vmatpush1.bf16.xpose.msra.mxu0 %v1016
        %1022 = vmatprep.subr.bf16.mxu0 0
        %1023 = vmatpush1.bf16.xpose.msra.mxu0 0
        %1024 = vmatprep.subr.bf16.mxu0 0
        %1025 = vmatpush1.bf16.xpose.msra.mxu0 0
        %1026 = vmatprep.subr.bf16.mxu0 0
        %1027 = vmatpush1.bf16.xpose.msra.mxu0 0
        %1028 = vmatprep.subr.bf16.mxu0 0
        %1029 = vmatpush1.bf16.xpose.msra.mxu0 0
        %1030 = vmatprep.subr.bf16.mxu0 0
        %1031 = vmatpush1.bf16.xpose.msra.mxu0 0
        %1032 = vmatprep.subr.bf16.mxu0 0
        %1033 = vmatpush1.bf16.xpose.msra.mxu0 0
        %1034 = vmatprep.subr.bf16.mxu0 0
        %1035 = vmatpush1.bf16.xpose.msra.mxu0 0
        %1036 = vmatprep.subr.bf16.mxu0 0
        %1037 = vmatpush1.bf16.xpose.msra.mxu0 0
        %1038 = vmatprep.subr.bf16.mxu0 0
        %1039 = vmatpush1.bf16.xpose.msra.mxu0 0
        %1040 = vmatprep.subr.bf16.mxu0 0
        %1041 = vmatpush1.bf16.xpose.msra.mxu0 0
        %1042 = vmatprep.subr.bf16.mxu0 0
        %1043 = vmatpush1.bf16.xpose.msra.mxu0 0
        %1044 = vmatprep.subr.bf16.mxu0 0
        %1045 = vmatpush1.bf16.xpose.msra.mxu0 0
        %1046 = vmatprep.subr.bf16.mxu0 0
        %1047 = vmatpush1.bf16.xpose.msra.mxu0 0
        %1048 = vmatprep.subr.bf16.mxu0 0
        %1049 = vmatpush1.bf16.xpose.msra.mxu0 0
        %1050 = vmatprep.mubr.bf16.mxu0 0
        %1051 = vmatmul.mubr.bf16.gmra.mrb[0].mxu0 %v1010
        %v1052 = vpop.f32.mrb[0].mxu0
        %v1053 = vadd.f32 %v998, %v1052
        %v1054 = vpop.f32.mrb[0].mxu0
        %v1055 = vpop.f32.mrb[0].mxu0
        %v1056 = vadd.f32 %v998, %v1055
        %v1057 = vpop.f32.mrb[0].mxu0
        %1058 = vdwg.mxu0
        %v1059 = vpack.c.bf16 %v375, %v374
        %v1060 = vlaneseq
        %v1061 = vshrl.u32 %v1060, 7
        %v1062 = vsub.s32 6, %v1061
        %v1063 = vrot.slane %v428, %v1062
        %v1068 = vunpack.c.l.b16 %v404
        %v1069 = vunpack.c.l.b16 %v405
        %v1070 = vunpack.c.l.b16 %v406
        %v1071 = vunpack.c.l.b16 %v407
        %v1072 = vpack.c.b16 %v1069, %v1068
        %v1073 = vpack.c.b16 %v1071, %v1070
        %v1075 = vsel %vm453, %v1059, 0
        %v1078 = vsel %vm453, %v1072, 0
        %v1081 = vsel %vm453, %v1073, 0
        %1083 = vmatprep.subr.bf16.mxu0 0
        %1084 = vmatpush1.bf16.xpose.msra.mxu0 %v1078
        %1085 = vmatprep.subr.bf16.mxu0 0
        %1086 = vmatpush1.bf16.xpose.msra.mxu0 %v1081
        %1087 = vmatprep.subr.bf16.mxu0 0
        %1088 = vmatpush1.bf16.xpose.msra.mxu0 0
        %1089 = vmatprep.subr.bf16.mxu0 0
        %1090 = vmatpush1.bf16.xpose.msra.mxu0 0
        %1091 = vmatprep.subr.bf16.mxu0 0
        %1092 = vmatpush1.bf16.xpose.msra.mxu0 0
        %1093 = vmatprep.subr.bf16.mxu0 0
        %1094 = vmatpush1.bf16.xpose.msra.mxu0 0
        %1095 = vmatprep.subr.bf16.mxu0 0
        %1096 = vmatpush1.bf16.xpose.msra.mxu0 0
        %1097 = vmatprep.subr.bf16.mxu0 0
        %1098 = vmatpush1.bf16.xpose.msra.mxu0 0
        %1099 = vmatprep.subr.bf16.mxu0 0
        %1100 = vmatpush1.bf16.xpose.msra.mxu0 0
        %1101 = vmatprep.subr.bf16.mxu0 0
        %1102 = vmatpush1.bf16.xpose.msra.mxu0 0
        %1103 = vmatprep.subr.bf16.mxu0 0
        %1104 = vmatpush1.bf16.xpose.msra.mxu0 0
        %1105 = vmatprep.subr.bf16.mxu0 0
        %1106 = vmatpush1.bf16.xpose.msra.mxu0 0
        %1107 = vmatprep.subr.bf16.mxu0 0
        %1108 = vmatpush1.bf16.xpose.msra.mxu0 0
        %1109 = vmatprep.subr.bf16.mxu0 0
        %1110 = vmatpush1.bf16.xpose.msra.mxu0 0
        %1111 = vmatprep.subr.bf16.mxu0 0
        %1112 = vmatpush1.bf16.xpose.msra.mxu0 0
        %1113 = vmatprep.subr.bf16.mxu0 0
        %1114 = vmatpush1.bf16.xpose.msra.mxu0 0
        %1115 = vmatprep.mubr.bf16.mxu0 0
        %1116 = vmatmul.mubr.bf16.gmra.mrb[0].mxu0 %v1075
        %v1117 = vpop.f32.mrb[0].mxu0
        %v1118 = vadd.f32 %v1063, %v1117
        %v1119 = vpop.f32.mrb[0].mxu0
        %v1120 = vpop.f32.mrb[0].mxu0
        %v1121 = vadd.f32 %v1063, %v1120
        %v1122 = vpop.f32.mrb[0].mxu0
        %1123 = vdwg.mxu0
        %v1124 = vadd.s32 %v589, 32
        %v1125 = vadd.s32 %v589, 40
        %v1126 = vadd.s32 %v589, 48
        %v1127 = vadd.s32 %v589, 56
        %v1128 = vcvt.s32.f32 %v1124
        %v1129 = vcvt.s32.f32 %v1125
        %v1130 = vcvt.s32.f32 %v1126
        %v1131 = vcvt.s32.f32 %v1127
        %v1132 = vadd.f32 %v1128, 0.5
        %v1133 = vadd.f32 %v1129, 0.5
        %v1134 = vadd.f32 %v1130, 0.5
        %v1135 = vadd.f32 %v1131, 0.5
        %v1136 = vmul.f32 %v600, 0.0625
        %v1137 = vmul.f32 %v601, 0.0625
        %v1138 = vmul.f32 %v602, 0.0625
        %v1139 = vmul.f32 %v603, 0.0625
        %v1140 = vmul.f32 %v1132, 0.0625
        %v1141 = vmul.f32 %v1133, 0.0625
        %v1142 = vmul.f32 %v1134, 0.0625
        %v1143 = vmul.f32 %v1135, 0.0625
        %v1144 = vfloor.f32 %v1136
        %v1145 = vfloor.f32 %v1137
        %v1146 = vfloor.f32 %v1138
        %v1147 = vfloor.f32 %v1139
        %v1148 = vfloor.f32 %v1140
        %v1149 = vfloor.f32 %v1141
        %v1150 = vfloor.f32 %v1142
        %v1151 = vfloor.f32 %v1143
        %vm1152 = vcmp.eq.f32.partialorder %v1144, %v614
        %vm1153 = vcmp.eq.f32.partialorder %v1145, %v614
        %vm1154 = vcmp.eq.f32.partialorder %v1146, %v614
        %vm1155 = vcmp.eq.f32.partialorder %v1147, %v614
        %vm1156 = vcmp.eq.f32.partialorder %v1148, %v614
        %vm1157 = vcmp.eq.f32.partialorder %v1149, %v614
        %vm1158 = vcmp.eq.f32.partialorder %v1150, %v614
        %vm1159 = vcmp.eq.f32.partialorder %v1151, %v614
        %v1160 = vsel %vm1152, 1, 0
        %v1161 = vsel %vm1153, 1, 0
        %v1162 = vsel %vm1154, 1, 0
        %v1163 = vsel %vm1155, 1, 0
        %v1164 = vsel %vm1156, 1, 0
        %v1165 = vsel %vm1157, 1, 0
        %v1166 = vsel %vm1158, 1, 0
        %v1167 = vsel %vm1159, 1, 0
        %v1168 = vcvt.s32.f32 %v1160
        %v1169 = vcvt.s32.f32 %v1161
        %v1170 = vcvt.s32.f32 %v1162
        %v1171 = vcvt.s32.f32 %v1163
        %v1172 = vcvt.s32.f32 %v1164
        %v1173 = vcvt.s32.f32 %v1165
        %v1174 = vcvt.s32.f32 %v1166
        %v1175 = vcvt.s32.f32 %v1167
        %v1176 = vmul.f32 %v1053, %v1168
        %v1177 = vmul.f32 %v1056, %v1169
        %v1178 = vmul.f32 %v1053, %v1170
        %v1179 = vmul.f32 %v1056, %v1171
        %v1180 = vmul.f32 %v1053, %v1172
        %v1181 = vmul.f32 %v1056, %v1173
        %v1182 = vmul.f32 %v1053, %v1174
        %v1183 = vmul.f32 %v1056, %v1175
        %v1184 = vmul.f32 %v1118, %v1168
        %v1185 = vmul.f32 %v1121, %v1169
        %v1186 = vmul.f32 %v1118, %v1170
        %v1187 = vmul.f32 %v1121, %v1171
        %v1188 = vmul.f32 %v1118, %v1172
        %v1189 = vmul.f32 %v1121, %v1173
        %v1190 = vmul.f32 %v1118, %v1174
        %v1191 = vmul.f32 %v1121, %v1175
        %v1192 = vpack.c.bf16 %v991, %v991
        %v1193 = vpack.c.bf16 %v1177, %v1176
        %v1194 = vpack.c.bf16 %v1179, %v1178
        %v1195 = vpack.c.bf16 %v1181, %v1180
        %v1196 = vpack.c.bf16 %v1183, %v1182
        %v1198 = vlaneseq
        %v1199 = vshrl.u32 %v1198, 7
        %v1200 = vsub.s32 0, %v1199
        %v1201 = vrot.slane %v379, %v1200
        %v1204 = vsel %vm453, %v1192, 0
        %v1207 = vsel %vm453, %v1193, 0
        %v1210 = vsel %vm453, %v1194, 0
        %v1213 = vsel %vm453, %v1195, 0
        %v1216 = vsel %vm453, %v1196, 0
        %1218 = vmatprep.subr.bf16.mxu0 0
        %1219 = vmatpush1.bf16.xpose.msra.mxu0 %v1207
        %1220 = vmatprep.subr.bf16.mxu0 0
        %1221 = vmatpush1.bf16.xpose.msra.mxu0 %v1210
        %1222 = vmatprep.subr.bf16.mxu0 0
        %1223 = vmatpush1.bf16.xpose.msra.mxu0 %v1213
        %1224 = vmatprep.subr.bf16.mxu0 0
        %1225 = vmatpush1.bf16.xpose.msra.mxu0 %v1216
        %1226 = vmatprep.subr.bf16.mxu0 0
        %1227 = vmatpush1.bf16.xpose.msra.mxu0 0
        %1228 = vmatprep.subr.bf16.mxu0 0
        %1229 = vmatpush1.bf16.xpose.msra.mxu0 0
        %1230 = vmatprep.subr.bf16.mxu0 0
        %1231 = vmatpush1.bf16.xpose.msra.mxu0 0
        %1232 = vmatprep.subr.bf16.mxu0 0
        %1233 = vmatpush1.bf16.xpose.msra.mxu0 0
        %1234 = vmatprep.subr.bf16.mxu0 0
        %1235 = vmatpush1.bf16.xpose.msra.mxu0 0
        %1236 = vmatprep.subr.bf16.mxu0 0
        %1237 = vmatpush1.bf16.xpose.msra.mxu0 0
        %1238 = vmatprep.subr.bf16.mxu0 0
        %1239 = vmatpush1.bf16.xpose.msra.mxu0 0
        %1240 = vmatprep.subr.bf16.mxu0 0
        %1241 = vmatpush1.bf16.xpose.msra.mxu0 0
        %1242 = vmatprep.subr.bf16.mxu0 0
        %1243 = vmatpush1.bf16.xpose.msra.mxu0 0
        %1244 = vmatprep.subr.bf16.mxu0 0
        %1245 = vmatpush1.bf16.xpose.msra.mxu0 0
        %1246 = vmatprep.subr.bf16.mxu0 0
        %1247 = vmatpush1.bf16.xpose.msra.mxu0 0
        %1248 = vmatprep.subr.bf16.mxu0 0
        %1249 = vmatpush1.bf16.xpose.msra.mxu0 0
        %1250 = vmatprep.mubr.bf16.mxu0 0
        %1251 = vmatmul.mubr.bf16.gmra.mrb[0].mxu0 %v1204
        %v1252 = vpop.f32.mrb[0].mxu0
        %v1253 = vadd.f32 %v1201, %v1252
        %v1254 = vpop.f32.mrb[0].mxu0
        %v1255 = vpop.f32.mrb[0].mxu0
        %v1256 = vpop.f32.mrb[0].mxu0
        %1257 = vdwg.mxu0
        %vm1258 = vcmask 523264
        %v1259 = vsel %vm1258, %v1253, -inf
        %1260 = vmax.xlane.f32.xlu0 %v1259
        %v1261 = vpop.xlane.xlu0 %1260
        %v1262 = vsub.f32 %v1253, %v1261
        %v1263 = vmax.f32 %v1262, -60.0
        %v1264 = vmul.f32 %v1263, 1.442695
        %v1265 = vpow.pop %v1264
        %v1266 = vmul.f32 %v612, 0.0625
        %v1267 = vfloor.f32 %v1266
        %vm1268 = vcmp.eq.f32.partialorder %v1144, %v1267
        %vm1269 = vcmp.eq.f32.partialorder %v1145, %v1267
        %vm1270 = vcmp.eq.f32.partialorder %v1146, %v1267
        %vm1271 = vcmp.eq.f32.partialorder %v1147, %v1267
        %vm1272 = vcmp.eq.f32.partialorder %v1148, %v1267
        %vm1273 = vcmp.eq.f32.partialorder %v1149, %v1267
        %vm1274 = vcmp.eq.f32.partialorder %v1150, %v1267
        %vm1275 = vcmp.eq.f32.partialorder %v1151, %v1267
        %v1276 = vsel %vm1268, 1, 0
        %v1277 = vsel %vm1269, 1, 0
        %v1278 = vsel %vm1270, 1, 0
        %v1279 = vsel %vm1271, 1, 0
        %v1280 = vsel %vm1272, 1, 0
        %v1281 = vsel %vm1273, 1, 0
        %v1282 = vsel %vm1274, 1, 0
        %v1283 = vsel %vm1275, 1, 0
        %v1284 = vcvt.s32.f32 %v1276
        %v1285 = vcvt.s32.f32 %v1277
        %v1286 = vcvt.s32.f32 %v1278
        %v1287 = vcvt.s32.f32 %v1279
        %v1288 = vcvt.s32.f32 %v1280
        %v1289 = vcvt.s32.f32 %v1281
        %v1290 = vcvt.s32.f32 %v1282
        %v1291 = vcvt.s32.f32 %v1283
        %v1293 = vsel %vm1258, %v1265, 0
        %1295 = vmatprep.subr.mxu0 0.0
        %1296 = vmatpush1.msra.mxu0 %v1284
        %1297 = vmatprep.subr.mxu0 0.0
        %1298 = vmatpush1.msra.mxu0 %v1285
        %1299 = vmatprep.subr.mxu0 0.0
        %1300 = vmatpush1.msra.mxu0 %v1286
        %1301 = vmatprep.subr.mxu0 0.0
        %1302 = vmatpush1.msra.mxu0 %v1287
        %1303 = vmatprep.subr.mxu0 0.0
        %1304 = vmatpush1.msra.mxu0 %v1288
        %1305 = vmatprep.subr.mxu0 0.0
        %1306 = vmatpush1.msra.mxu0 %v1289
        %1307 = vmatprep.subr.mxu0 0.0
        %1308 = vmatpush1.msra.mxu0 %v1290
        %1309 = vmatprep.subr.mxu0 0.0
        %1310 = vmatpush1.msra.mxu0 %v1291
        %1311 = vmatprep.subr.mxu0 0.0
        %1312 = vmatpush1.msra.mxu0 0.0
        %1313 = vmatprep.subr.mxu0 0.0
        %1314 = vmatpush1.msra.mxu0 0.0
        %1315 = vmatprep.subr.mxu0 0.0
        %1316 = vmatpush1.msra.mxu0 0.0
        %1317 = vmatprep.subr.mxu0 0.0
        %1318 = vmatpush1.msra.mxu0 0.0
        %1319 = vmatprep.subr.mxu0 0.0
        %1320 = vmatpush1.msra.mxu0 0.0
        %1321 = vmatprep.subr.mxu0 0.0
        %1322 = vmatpush1.msra.mxu0 0.0
        %1323 = vmatprep.subr.mxu0 0.0
        %1324 = vmatpush1.msra.mxu0 0.0
        %1325 = vmatprep.subr.mxu0 0.0
        %1326 = vmatpush1.msra.mxu0 0.0
        %1327 = vmatprep.subr.mxu0 0.0
        %1328 = vmatpush1.msra.mxu0 0.0
        %1329 = vmatprep.subr.mxu0 0.0
        %1330 = vmatpush1.msra.mxu0 0.0
        %1331 = vmatprep.subr.mxu0 0.0
        %1332 = vmatpush1.msra.mxu0 0.0
        %1333 = vmatprep.subr.mxu0 0.0
        %1334 = vmatpush1.msra.mxu0 0.0
        %1335 = vmatprep.subr.mxu0 0.0
        %1336 = vmatpush1.msra.mxu0 0.0
        %1337 = vmatprep.subr.mxu0 0.0
        %1338 = vmatpush1.msra.mxu0 0.0
        %1339 = vmatprep.subr.mxu0 0.0
        %1340 = vmatpush1.msra.mxu0 0.0
        %1341 = vmatprep.subr.mxu0 0.0
        %1342 = vmatpush1.msra.mxu0 0.0
        %1343 = vmatprep.subr.mxu0 0.0
        %1344 = vmatpush1.msra.mxu0 0.0
        %1345 = vmatprep.subr.mxu0 0.0
        %1346 = vmatpush1.msra.mxu0 0.0
        %1347 = vmatprep.subr.mxu0 0.0
        %1348 = vmatpush1.msra.mxu0 0.0
        %1349 = vmatprep.subr.mxu0 0.0
        %1350 = vmatpush1.msra.mxu0 0.0
        %1351 = vmatprep.subr.mxu0 0.0
        %1352 = vmatpush1.msra.mxu0 0.0
        %1353 = vmatprep.subr.mxu0 0.0
        %1354 = vmatpush1.msra.mxu0 0.0
        %1355 = vmatprep.subr.mxu0 0.0
        %1356 = vmatpush1.msra.mxu0 0.0
        %1357 = vmatprep.subr.mxu0 0.0
        %1358 = vmatpush1.msra.mxu0 0.0
        %1359 = vmatprep.mubr.f32.mxu0 0.0
        %1360 = vmatmul.mubr.f32.gmra.mrb[0].mxu0 %v1293
        %v1361 = vpop.f32.mrb[0].mxu0
        %v1362 = vadd.f32 0.0, %v1361
        %v1363 = vpop.f32.mrb[0].mxu0
        %1364 = vdwg.mxu0
        %v1365 = vrcp.pop %v1362
        %v1366 = vmul.f32 %v1265, %v1365
        %v1367 = vpack.c.bf16 %v1366, %v1366
        %v1368 = vpack.c.bf16 %v1185, %v1184
        %v1369 = vpack.c.bf16 %v1187, %v1186
        %v1370 = vpack.c.bf16 %v1189, %v1188
        %v1371 = vpack.c.bf16 %v1191, %v1190
        %v1373 = vsel %vm1258, %v1367, 0
        %1375 = vmatprep.subr.bf16.mxu0 0
        %1376 = vmatpush1.bf16.msra.mxu0 %v1368
        %1377 = vmatprep.subr.bf16.mxu0 0
        %1378 = vmatpush1.bf16.msra.mxu0 %v1369
        %1379 = vmatprep.subr.bf16.mxu0 0
        %1380 = vmatpush1.bf16.msra.mxu0 %v1370
        %1381 = vmatprep.subr.bf16.mxu0 0
        %1382 = vmatpush1.bf16.msra.mxu0 %v1371
        %1383 = vmatprep.subr.bf16.mxu0 0
        %1384 = vmatpush1.bf16.msra.mxu0 0
        %1385 = vmatprep.subr.bf16.mxu0 0
        %1386 = vmatpush1.bf16.msra.mxu0 0
        %1387 = vmatprep.subr.bf16.mxu0 0
        %1388 = vmatpush1.bf16.msra.mxu0 0
        %1389 = vmatprep.subr.bf16.mxu0 0
        %1390 = vmatpush1.bf16.msra.mxu0 0
        %1391 = vmatprep.subr.bf16.mxu0 0
        %1392 = vmatpush1.bf16.msra.mxu0 0
        %1393 = vmatprep.subr.bf16.mxu0 0
        %1394 = vmatpush1.bf16.msra.mxu0 0
        %1395 = vmatprep.subr.bf16.mxu0 0
        %1396 = vmatpush1.bf16.msra.mxu0 0
        %1397 = vmatprep.subr.bf16.mxu0 0
        %1398 = vmatpush1.bf16.msra.mxu0 0
        %1399 = vmatprep.subr.bf16.mxu0 0
        %1400 = vmatpush1.bf16.msra.mxu0 0
        %1401 = vmatprep.subr.bf16.mxu0 0
        %1402 = vmatpush1.bf16.msra.mxu0 0
        %1403 = vmatprep.subr.bf16.mxu0 0
        %1404 = vmatpush1.bf16.msra.mxu0 0
        %1405 = vmatprep.subr.bf16.mxu0 0
        %1406 = vmatpush1.bf16.msra.mxu0 0
        %1407 = vmatprep.mubr.bf16.mxu0 0
        %1408 = vmatmul.mubr.bf16.gmra.mrb[0].mxu0 %v1373
        %v1409 = vpop.f32.mrb[0].mxu0
        %v1410 = vadd.f32 0.0, %v1409
        %v1411 = vpop.f32.mrb[0].mxu0
        %v1412 = vpop.f32.mrb[0].mxu0
        %v1413 = vpop.f32.mrb[0].mxu0
        %1414 = vdwg.mxu0
        %v1415 = vpack.c.bf16 %v1410, %v1410
        %v1416 = vlaneseq
        %v1417 = vshrl.u32 %v1416, 7
        %v1418 = vsub.s32 7, %v1417
        %v1419 = vrot.slane %v428, %v1418
        %v1424 = vunpack.c.l.b16 %v408
        %v1425 = vunpack.c.l.b16 %v409
        %v1426 = vunpack.c.l.b16 %v410
        %v1427 = vunpack.c.l.b16 %v411
        %v1428 = vpack.c.b16 %v1425, %v1424
        %v1429 = vpack.c.b16 %v1427, %v1426
        %v1431 = vsel %vm453, %v1415, 0
        %v1434 = vsel %vm453, %v1428, 0
        %v1437 = vsel %vm453, %v1429, 0
        %1439 = vmatprep.subr.bf16.mxu0 0
        %1440 = vmatpush1.bf16.xpose.msra.mxu0 %v1434
        %1441 = vmatprep.subr.bf16.mxu0 0
        %1442 = vmatpush1.bf16.xpose.msra.mxu0 %v1437
        %1443 = vmatprep.subr.bf16.mxu0 0
        %1444 = vmatpush1.bf16.xpose.msra.mxu0 0
        %1445 = vmatprep.subr.bf16.mxu0 0
        %1446 = vmatpush1.bf16.xpose.msra.mxu0 0
        %1447 = vmatprep.subr.bf16.mxu0 0
        %1448 = vmatpush1.bf16.xpose.msra.mxu0 0
        %1449 = vmatprep.subr.bf16.mxu0 0
        %1450 = vmatpush1.bf16.xpose.msra.mxu0 0
        %1451 = vmatprep.subr.bf16.mxu0 0
        %1452 = vmatpush1.bf16.xpose.msra.mxu0 0
        %1453 = vmatprep.subr.bf16.mxu0 0
        %1454 = vmatpush1.bf16.xpose.msra.mxu0 0
        %1455 = vmatprep.subr.bf16.mxu0 0
        %1456 = vmatpush1.bf16.xpose.msra.mxu0 0
        %1457 = vmatprep.subr.bf16.mxu0 0
        %1458 = vmatpush1.bf16.xpose.msra.mxu0 0
        %1459 = vmatprep.subr.bf16.mxu0 0
        %1460 = vmatpush1.bf16.xpose.msra.mxu0 0
        %1461 = vmatprep.subr.bf16.mxu0 0
        %1462 = vmatpush1.bf16.xpose.msra.mxu0 0
        %1463 = vmatprep.subr.bf16.mxu0 0
        %1464 = vmatpush1.bf16.xpose.msra.mxu0 0
        %1465 = vmatprep.subr.bf16.mxu0 0
        %1466 = vmatpush1.bf16.xpose.msra.mxu0 0
        %1467 = vmatprep.subr.bf16.mxu0 0
        %1468 = vmatpush1.bf16.xpose.msra.mxu0 0
        %1469 = vmatprep.subr.bf16.mxu0 0
        %1470 = vmatpush1.bf16.xpose.msra.mxu0 0
        %1471 = vmatprep.mubr.bf16.mxu0 0
        %1472 = vmatmul.mubr.bf16.gmra.mrb[0].mxu0 %v1431
        %v1473 = vpop.f32.mrb[0].mxu0
        %v1474 = vadd.f32 %v1419, %v1473
        %v1475 = vpop.f32.mrb[0].mxu0
        %v1476 = vpop.f32.mrb[0].mxu0
        %v1477 = vpop.f32.mrb[0].mxu0
        %1478 = vdwg.mxu0
        %v1479 = vadd.f32 %v925, %v1474
        %v1480 = vsel %vm453, %v1479, 0.0
        %1481 = vadd.xlane.f32.xlu0 %v1480
        %v1482 = vpop.xlane.xlu0 %1481
        %v1483 = vmul.f32 %v1482, %v905
        %v1484 = vsub.f32 %v1479, %v1483
        %v1485 = vmul.f32 %v1484, %v1484
        %v1486 = vsel %vm453, %v1485, 0.0
        %1487 = vadd.xlane.f32.xlu0 %v1486
        %v1488 = vpop.xlane.xlu0 %1487
        %v1489 = vmul.f32 %v1488, %v905
        %v1490 = vadd.f32 %v1489, 1e-05
        %v1491 = vrsqrt.pop %v1490
        %v1492 = vmul.f32 %v1484, %v1491
        %v1493 = vlaneseq
        %v1494 = vshrl.u32 %v1493, 7
        %v1495 = vsub.s32 3, %v1494
        %v1496 = vrot.slane %v429, %v1495
        %v1497 = vmul.f32 %v1492, %v1496
        %v1498 = vlaneseq
        %v1499 = vshrl.u32 %v1498, 7
        %v1500 = vsub.s32 4, %v1499
        %v1501 = vrot.slane %v429, %v1500
        %v1502 = vadd.f32 %v1497, %v1501
        %v1503 = vpack.c.bf16 %v1502, %v1502
        %v1505 = vlaneseq
        %v1506 = vshrl.u32 %v1505, 7
        %v1507 = vsub.s32 0, %v1506
        %v1508 = vrot.slane %v430, %v1507
        %v1518 = vunpack.c.l.b16 %v412
        %v1519 = vunpack.c.l.b16 %v413
        %v1520 = vunpack.c.l.b16 %v414
        %v1521 = vunpack.c.l.b16 %v415
        %v1522 = vunpack.c.l.b16 %v416
        %v1523 = vunpack.c.l.b16 %v417
        %v1524 = vunpack.c.l.b16 %v418
        %v1525 = vunpack.c.l.b16 %v419
        %v1526 = vpack.c.b16 %v1519, %v1518
        %v1527 = vpack.c.b16 %v1521, %v1520
        %v1528 = vpack.c.b16 %v1523, %v1522
        %v1529 = vpack.c.b16 %v1525, %v1524
        %v1531 = vsel %vm453, %v1503, 0
        %v1534 = vsel %vm453, %v1526, 0
        %v1537 = vsel %vm453, %v1527, 0
        %v1540 = vsel %vm453, %v1528, 0
        %v1543 = vsel %vm453, %v1529, 0
        %1545 = vmatprep.subr.bf16.mxu0 0
        %1546 = vmatpush1.bf16.xpose.msra.mxu0 %v1534
        %1547 = vmatprep.subr.bf16.mxu0 0
        %1548 = vmatpush1.bf16.xpose.msra.mxu0 %v1537
        %1549 = vmatprep.subr.bf16.mxu0 0
        %1550 = vmatpush1.bf16.xpose.msra.mxu0 %v1540
        %1551 = vmatprep.subr.bf16.mxu0 0
        %1552 = vmatpush1.bf16.xpose.msra.mxu0 %v1543
        %1553 = vmatprep.subr.bf16.mxu0 0
        %1554 = vmatpush1.bf16.xpose.msra.mxu0 0
        %1555 = vmatprep.subr.bf16.mxu0 0
        %1556 = vmatpush1.bf16.xpose.msra.mxu0 0
        %1557 = vmatprep.subr.bf16.mxu0 0
        %1558 = vmatpush1.bf16.xpose.msra.mxu0 0
        %1559 = vmatprep.subr.bf16.mxu0 0
        %1560 = vmatpush1.bf16.xpose.msra.mxu0 0
        %1561 = vmatprep.subr.bf16.mxu0 0
        %1562 = vmatpush1.bf16.xpose.msra.mxu0 0
        %1563 = vmatprep.subr.bf16.mxu0 0
        %1564 = vmatpush1.bf16.xpose.msra.mxu0 0
        %1565 = vmatprep.subr.bf16.mxu0 0
        %1566 = vmatpush1.bf16.xpose.msra.mxu0 0
        %1567 = vmatprep.subr.bf16.mxu0 0
        %1568 = vmatpush1.bf16.xpose.msra.mxu0 0
        %1569 = vmatprep.subr.bf16.mxu0 0
        %1570 = vmatpush1.bf16.xpose.msra.mxu0 0
        %1571 = vmatprep.subr.bf16.mxu0 0
        %1572 = vmatpush1.bf16.xpose.msra.mxu0 0
        %1573 = vmatprep.subr.bf16.mxu0 0
        %1574 = vmatpush1.bf16.xpose.msra.mxu0 0
        %1575 = vmatprep.subr.bf16.mxu0 0
        %1576 = vmatpush1.bf16.xpose.msra.mxu0 0
        %1577 = vmatprep.mubr.bf16.mxu0 0
        %1578 = vmatmul.mubr.bf16.gmra.mrb[0].mxu0 %v1531
        %v1579 = vpop.f32.mrb[0].mxu0
        %v1580 = vadd.f32 %v1508, %v1579
        %v1581 = vpop.f32.mrb[0].mxu0
        %v1582 = vpop.f32.mrb[0].mxu0
        %v1583 = vpop.f32.mrb[0].mxu0
        %1584 = vdwg.mxu0
        %v1585 = vmax.f32 %v1580, 0.0
        %v1586 = vpack.c.bf16 %v1585, %v1585
        %v1587 = vlaneseq
        %v1588 = vshrl.u32 %v1587, 7
        %v1589 = vsub.s32 0, %v1588
        %v1590 = vrot.slane %v429, %v1589
        %v1599 = vunpack.c.l.b16 %v420
        %v1600 = vunpack.c.l.b16 %v421
        %v1601 = vunpack.c.l.b16 %v422
        %v1602 = vunpack.c.l.b16 %v423
        %v1603 = vunpack.c.l.b16 %v424
        %v1604 = vunpack.c.l.b16 %v425
        %v1605 = vunpack.c.l.b16 %v426
        %v1606 = vunpack.c.l.b16 %v427
        %v1607 = vpack.c.b16 %v1600, %v1599
        %v1608 = vpack.c.b16 %v1602, %v1601
        %v1609 = vpack.c.b16 %v1604, %v1603
        %v1610 = vpack.c.b16 %v1606, %v1605
        %v1616 = vsel %vm1258, %v1586, 0
        %1618 = vmatprep.subr.bf16.mxu0 0
        %1619 = vmatpush1.bf16.msra.mxu0 %v1607
        %1620 = vmatprep.subr.bf16.mxu0 0
        %1621 = vmatpush1.bf16.msra.mxu0 %v1608
        %1622 = vmatprep.subr.bf16.mxu0 0
        %1623 = vmatpush1.bf16.msra.mxu0 %v1609
        %1624 = vmatprep.subr.bf16.mxu0 0
        %1625 = vmatpush1.bf16.msra.mxu0 %v1610
        %1626 = vmatprep.subr.bf16.mxu0 0
        %1627 = vmatpush1.bf16.msra.mxu0 0
        %1628 = vmatprep.subr.bf16.mxu0 0
        %1629 = vmatpush1.bf16.msra.mxu0 0
        %1630 = vmatprep.subr.bf16.mxu0 0
        %1631 = vmatpush1.bf16.msra.mxu0 0
        %1632 = vmatprep.subr.bf16.mxu0 0
        %1633 = vmatpush1.bf16.msra.mxu0 0
        %1634 = vmatprep.subr.bf16.mxu0 0
        %1635 = vmatpush1.bf16.msra.mxu0 0
        %1636 = vmatprep.subr.bf16.mxu0 0
        %1637 = vmatpush1.bf16.msra.mxu0 0
        %1638 = vmatprep.subr.bf16.mxu0 0
        %1639 = vmatpush1.bf16.msra.mxu0 0
        %1640 = vmatprep.subr.bf16.mxu0 0
        %1641 = vmatpush1.bf16.msra.mxu0 0
        %1642 = vmatprep.subr.bf16.mxu0 0
        %1643 = vmatpush1.bf16.msra.mxu0 0
        %1644 = vmatprep.subr.bf16.mxu0 0
        %1645 = vmatpush1.bf16.msra.mxu0 0
        %1646 = vmatprep.subr.bf16.mxu0 0
        %1647 = vmatpush1.bf16.msra.mxu0 0
        %1648 = vmatprep.subr.bf16.mxu0 0
        %1649 = vmatpush1.bf16.msra.mxu0 0
        %1650 = vmatprep.mubr.bf16.mxu0 0
        %1651 = vmatmul.mubr.bf16.gmra.mrb[0].mxu0 %v1616
        %v1652 = vpop.f32.mrb[0].mxu0
        %v1653 = vadd.f32 %v1590, %v1652
        %v1654 = vpop.f32.mrb[0].mxu0
        %v1655 = vpop.f32.mrb[0].mxu0
        %v1656 = vpop.f32.mrb[0].mxu0
        %1657 = vdwg.mxu0
        %v1658 = vadd.f32 %v1502, %v1653
        %v1659 = vsel %vm453, %v1658, 0.0
        %1660 = vadd.xlane.f32.xlu0 %v1659
        %v1661 = vpop.xlane.xlu0 %1660
        %v1662 = vmul.f32 %v1661, %v905
        %v1663 = vsub.f32 %v1658, %v1662
        %v1664 = vmul.f32 %v1663, %v1663
        %v1665 = vsel %vm453, %v1664, 0.0
        %1666 = vadd.xlane.f32.xlu0 %v1665
        %v1667 = vpop.xlane.xlu0 %1666
        %v1668 = vmul.f32 %v1667, %v905
        %v1669 = vadd.f32 %v1668, 1e-05
        %v1670 = vrsqrt.pop %v1669
        %v1671 = vmul.f32 %v1663, %v1670
        %v1672 = vlaneseq
        %v1673 = vshrl.u32 %v1672, 7
        %v1674 = vsub.s32 5, %v1673
        %v1675 = vrot.slane %v429, %v1674
        %v1676 = vmul.f32 %v1671, %v1675
        %v1677 = vlaneseq
        %v1678 = vshrl.u32 %v1677, 7
        %v1679 = vsub.s32 6, %v1678
        %v1680 = vrot.slane %v429, %v1679
        %v1681 = vadd.f32 %v1676, %v1680
        %1682 = vst.msk [vmem:[%s350] sm:$0xff] %vm453, %v1681
        %s1683 = sand.u32 %s223, 1
        %s1684 = scalar_lea.sflag [#allocation3], %s1683
        %s1685 = sand.u32 %s223, 1
        %s1686 = smul.addr %s1685, 8
        %s1687 = scalar_lea.vmem [#allocation2], %s1686
        // Predicated region
        $region53: #{tpu_custom_call.1} parent=51 // pred_check
          %p1688 = pneg %p233
        $region54: #{tpu_custom_call.1} parent=51 // pred_check_branch
          %1690 = sbr.rel (%p1688) target = $region56
        $region55: #{tpu_custom_call.1} parent=51 // pred_region
          %s1692 = ssub.s32 128, 128
          %1693 = vsyncadd %s1684, %s1692
          %s1694 = smul.addr %s22, 128
          %s1695 = scalar_lea.hbm %s8, %s1694
          %s1697 = sshll.u32 %s1687, 4
          %s1698 = int_to_ptr.vmem [resolvable:$true] %s1697
          %1700 = dma.vmem_to_hbm [thread:$0]  %s1698, 128, %s1695, %s1684
        $region56: #{tpu_custom_call.1} parent=51 // pred_fallthru
          _
      $region52: #{tpu_custom_call.1} parent=5 // pred_fallthru
        _
      %p1701 = scmp.le.s32.totalorder 2, %s17
      // Predicated region
      $region57: #{tpu_custom_call.1} parent=5 // pred_check
        %p1702 = pneg %p1701
      $region58: #{tpu_custom_call.1} parent=5 // pred_check_branch
        %1704 = sbr.rel (%p1702) target = $region60
      $region59: #{tpu_custom_call.1} parent=5 // pred_region
        %s1705 = ssub.s32 %s17, 2
        // Predicated region
        $region61: #{tpu_custom_call.1} parent=59 // pred_check
          %p1706 = pneg %p239
        $region62: #{tpu_custom_call.1} parent=59 // pred_check_branch
          %1708 = sbr.rel (%p1706) target = $region64
        $region63: #{tpu_custom_call.1} parent=59 // pred_region
          %s1709 = sand.u32 %s224, 1
          %s1710 = scalar_lea.sflag [#allocation3], %s1709
          %s1711 = sand.u32 %s224, 1
          %s1712 = smul.addr %s1711, 8
          %s1713 = scalar_lea.vmem [#allocation2], %s1712
          %1714 = dma.done %s1710, 128
        $region64: #{tpu_custom_call.1} parent=59 // pred_fallthru
          _
      $region60: #{tpu_custom_call.1} parent=5 // pred_fallthru
        _
    $region6: #{tpu_custom_call.1} parent=1 // loop_footer
      %s21 = sadd.s32 1, %s17
    $region7: #{tpu_custom_call.1} parent=1 // loop_footer_branch
      %16 = sbr.rel target = $region3
    $region8: #{tpu_custom_call.1} parent=1 // loop_exit
      _
    %1715 = vsyncpa [#allocation3], 1
    %s1716 = scalar_lea.sflag [#allocation3], 1
    %1717 = vsyncpa %s1716, 1

</llo_original>
